<compile_context>
chip_gen: v7x
topology: tpu7x:2x2x1
jax: 0.10.0
libtpu: 0.0.40
codegen_flags: <defaults>
</compile_context>

<pallas_src>
import math

import jax
import jax.numpy as jnp
from jax.experimental import pallas as pl
from jax.experimental.pallas import tpu as pltpu

B = 8                    # batch
HID = 128                # hidden_size
N_HEAD = 16              # n_head (collapses out of the math, see note above)
N_LAYERS = 1             # num_layers (module default)
Q_PAIRS = 32 * 32        # complex features of Q
Q_INP = Q_PAIRS * 2      # view_as_real(Q).reshape(B, -1) feature size
KDIM = Q_INP + HID       # packed emb contraction dim: Re | Im | cqi | m | 0-pad
LN_EPS = 1e-5
SC_ROWS = ((1 + 9 * N_LAYERS + 7) // 8) * 8   # padded rows of the f32 bias slab


# ---------------------------------------------------------------- helpers ---
def _layernorm(x, gamma, beta):
    mu = jnp.mean(x, axis=-1, keepdims=True)
    xc = x - mu
    var = jnp.mean(xc * xc, axis=-1, keepdims=True)
    return xc * jax.lax.rsqrt(var + LN_EPS) * gamma + beta


def _new_gelu(x):
    c = math.sqrt(2.0 / math.pi)
    return 0.5 * x * (1.0 + jnp.tanh(c * (x + 0.044715 * x * x * x)))


# ------------------------------------------------------------ fused kernel ---
def fused_kernel(qx_ref, wq_ref, lw_ref, sc_ref, kv_ref, vnext_ref):
    # ---- AttenEmb: one K=2176 matmul covers emb_Q + emb_cqi + emb_m --------
    x = jnp.dot(qx_ref[...], wq_ref[...], preferred_element_type=jnp.float32)
    x = x + sc_ref[0:1, :]                              # fused bias bq+bc+bm

    # ---- Blocks (his_data=None path): attention output == v ----------------
    for l in range(N_LAYERS):
        r = 1 + 9 * l                                   # base row in bias slab
        h = _layernorm(x, sc_ref[r + 0:r + 1, :], sc_ref[r + 1:r + 2, :])
        # fused [k | v | v@Wproj] matmul (q columns dropped, Wv@Wproj pre-fused)
        kvv = jnp.dot(h.astype(jnp.bfloat16), lw_ref[l, :, 0:3 * HID],
                      preferred_element_type=jnp.float32)
        k = kvv[:, 0:HID] + sc_ref[r + 2:r + 3, :]
        v = kvv[:, HID:2 * HID] + sc_ref[r + 3:r + 4, :]
        v_attn = kvv[:, 2 * HID:3 * HID] + sc_ref[r + 4:r + 5, :]
        kv_ref[l] = jnp.concatenate([k, v], axis=-1)    # one [B, 256] store

        y = x + v_attn
        h2 = _layernorm(y, sc_ref[r + 5:r + 6, :], sc_ref[r + 6:r + 7, :])
        mlp = _new_gelu(
            jnp.dot(h2.astype(jnp.bfloat16), lw_ref[l, :, 3 * HID:4 * HID],
                    preferred_element_type=jnp.float32) + sc_ref[r + 7:r + 8, :])
        mlp = jnp.dot(mlp.astype(jnp.bfloat16), lw_ref[l, :, 4 * HID:5 * HID],
                      preferred_element_type=jnp.float32) + sc_ref[r + 8:r + 9, :]
        x = y + mlp
    vnext_ref[...] = x


# ----------------------------------------------------------------- params ---
def init_params(key):
    """Raw module-style params (linear weights stored [in_features, out_features])."""
    def lin(k, fan_in, fan_out):
        kw, kb = jax.random.split(k)
        bound = 1.0 / math.sqrt(fan_in)
        w = jax.random.uniform(kw, (fan_in, fan_out), jnp.float32, -bound, bound)
        b = jax.random.uniform(kb, (1, fan_out), jnp.float32, -bound, bound)
        return w, b

    keys = jax.random.split(key, 3 + N_LAYERS)
    wq, bq = lin(keys[0], Q_INP, HID)
    wc, bc = lin(keys[1], 1, HID)
    wm, bm = lin(keys[2], 1, HID)
    raw = {"emb": dict(wq=wq, bq=bq, wc=wc, bc=bc, wm=wm, bm=bm), "layers": []}
    for i in range(N_LAYERS):
        lk = jax.random.split(keys[3 + i], 4)
        wattn, battn = lin(lk[0], HID, 3 * HID)
        wproj, bproj = lin(lk[1], HID, HID)
        wfc, bfc = lin(lk[2], HID, HID)
        wcp, bcp = lin(lk[3], HID, HID)
        raw["layers"].append(dict(
            g1=jnp.ones((1, HID), jnp.float32), b1=jnp.zeros((1, HID), jnp.float32),
            wattn=wattn, battn=battn, wproj=wproj, bproj=bproj,
            g2=jnp.ones((1, HID), jnp.float32), b2=jnp.zeros((1, HID), jnp.float32),
            wfc=wfc, bfc=bfc, wcp=wcp, bcp=bcp))
    return raw


def prepare_params(raw):
    """One-time host-side preprocessing into the kernel-ready packed layout."""
    e = raw["emb"]
    wq = e["wq"]                                            # [2048, 128]
    # Packed emb weight: rows [wq even | wq odd | w_cqi | w_m | zero pad].
    w_emb = jnp.zeros((KDIM, HID), jnp.float32)
    w_emb = w_emb.at[0:Q_PAIRS].set(wq[0::2, :])
    w_emb = w_emb.at[Q_PAIRS:2 * Q_PAIRS].set(wq[1::2, :])
    w_emb = w_emb.at[2 * Q_PAIRS].set(e["wc"][0])
    w_emb = w_emb.at[2 * Q_PAIRS + 1].set(e["wm"][0])
    w_emb = w_emb.astype(jnp.bfloat16)

    sc_rows = [(e["bq"] + e["bc"] + e["bm"])[0]]            # fused emb bias
    lw_list = []
    for lp in raw["layers"]:
        wk = lp["wattn"][:, HID:2 * HID]
        wv = lp["wattn"][:, 2 * HID:]
        wvp = wv @ lp["wproj"]                              # pre-fused Wv @ Wproj
        bk = lp["battn"][0, HID:2 * HID]
        bv = lp["battn"][0, 2 * HID:]
        bvp = (lp["battn"][0:1, 2 * HID:] @ lp["wproj"] + lp["bproj"])[0]
        lw = jnp.concatenate([wk, wv, wvp, lp["wfc"], lp["wcp"]], axis=1)
        lw_list.append(lw.astype(jnp.bfloat16))             # [128, 640]
        sc_rows += [lp["g1"][0], lp["b1"][0], bk, bv, bvp,
                    lp["g2"][0], lp["b2"][0], lp["bfc"][0], lp["bcp"][0]]
    sc = jnp.stack(sc_rows, axis=0)
    pad = SC_ROWS - sc.shape[0]
    if pad:
        sc = jnp.concatenate([sc, jnp.zeros((pad, HID), jnp.float32)], axis=0)
    return dict(w_emb=w_emb, lw=jnp.stack(lw_list, axis=0), sc=sc)


# ---------------------------------------------------------------- forward ---
@jax.jit
def atten_cell_forward(Q_c, cqi, m, kp):
    """his_data=None path of AttenCell.forward for T independent timesteps.

    Q_c: [T, B, 32, 32] complex64 (or [B, 32, 32] for a single step)
    cqi, m: [T, B] (or [B])
    Returns kv [T, L, B, 2*HID] (k|v concatenated) and v_next [T, B, HID].
    """
    if Q_c.ndim == 3:
        Q_c, cqi, m = Q_c[None], cqi[None], m[None]
    T, nB = Q_c.shape[0], Q_c.shape[1]

    # Pack Re | Im | cqi | m | zero-pad into one bf16 activation slab.
    qx = jnp.zeros((T, nB, KDIM), jnp.float32)
    qx = qx.at[:, :, 0:Q_PAIRS].set(jnp.real(Q_c).reshape(T, nB, -1))
    qx = qx.at[:, :, Q_PAIRS:2 * Q_PAIRS].set(jnp.imag(Q_c).reshape(T, nB, -1))
    qx = qx.at[:, :, 2 * Q_PAIRS].set(cqi.astype(jnp.float32))
    qx = qx.at[:, :, 2 * Q_PAIRS + 1].set(m.astype(jnp.float32))
    qx = qx.astype(jnp.bfloat16)

    cost = pl.CostEstimate(
        flops=T * (2 * nB * KDIM * HID + N_LAYERS * 2 * nB * HID * 5 * HID),
        transcendentals=T * N_LAYERS * nB * HID,
        bytes_accessed=(KDIM * HID * 2 + N_LAYERS * HID * 5 * HID * 2
                        + SC_ROWS * HID * 4
                        + T * (nB * KDIM * 2
                               + nB * (2 * N_LAYERS * HID + HID) * 4)),
    )

    kv, vnext = pl.pallas_call(
        fused_kernel,
        out_shape=(jax.ShapeDtypeStruct((T, N_LAYERS, nB, 2 * HID), jnp.float32),
                   jax.ShapeDtypeStruct((T, nB, HID), jnp.float32)),
        grid=(T,),
        in_specs=[
            # per-step activation slab
            pl.BlockSpec((None, nB, KDIM), lambda t: (t, 0, 0)),
            # weights: constant index_map -> DMA'd once, stay VMEM-resident
            pl.BlockSpec((KDIM, HID), lambda t: (0, 0)),
            pl.BlockSpec((N_LAYERS, HID, 5 * HID), lambda t: (0, 0, 0)),
            pl.BlockSpec((SC_ROWS, HID), lambda t: (0, 0)),
        ],
        out_specs=(pl.BlockSpec((None, N_LAYERS, nB, 2 * HID), lambda t: (t, 0, 0, 0)),
                   pl.BlockSpec((None, nB, HID), lambda t: (t, 0, 0))),
        compiler_params=pltpu.CompilerParams(dimension_semantics=("parallel",)),
        cost_estimate=cost,
    )(qx, kp["w_emb"], kp["lw"], kp["sc"])
    return kv, vnext


def format_step(kv, vnext, t):
    """Rebuild the module's per-call output dict for timestep t."""
    cur_data = [(kv[t, l, :, None, :HID], kv[t, l, :, None, HID:])
                for l in range(N_LAYERS)]
    return {"data": cur_data, "Q_feature": vnext[t], "H_feature": vnext[t]}


# -------------------------------------------------- pure-JAX f32 reference ---
def reference_forward(Q_c, cqi, m, raw):
    """Literal f32 transcription of the PyTorch module (his_data=None path)."""
    nB = Q_c.shape[0]
    Q = jnp.stack([jnp.real(Q_c), jnp.imag(Q_c)], axis=-1).reshape(nB, -1)
    e = raw["emb"]
    x = (m[:, None] * e["wm"] + e["bm"]
         + cqi[:, None] * e["wc"] + e["bc"]
         + Q @ e["wq"] + e["bq"])
    data = []
    for lp in raw["layers"]:
        h = _layernorm(x, lp["g1"], lp["b1"])
        qkv = h @ lp["wattn"] + lp["battn"]
        k, v = qkv[:, HID:2 * HID], qkv[:, 2 * HID:]
        # softmax over the size-1 attention axis is 1.0 -> attention output == v
        y = x + (v @ lp["wproj"] + lp["bproj"])
        h2 = _layernorm(y, lp["g2"], lp["b2"])
        x = y + (_new_gelu(h2 @ lp["wfc"] + lp["bfc"]) @ lp["wcp"] + lp["bcp"])
        data.append((k[:, None, :], v[:, None, :]))
    return data, x


# ------------------------------------------------------------------- main ---
if __name__ == "__main__":
    import numpy as np

    T = 4                                    # independent timesteps (amortized weights)
    key = jax.random.PRNGKey(0)
    k_par, kqr, kqi, kc, km = jax.random.split(key, 5)

    raw_params = init_params(k_par)
    kern_params = prepare_params(raw_params)

    Q_c = (jax.random.normal(kqr, (T, B, 32, 32), jnp.float32)
           + 1j * jax.random.normal(kqi, (T, B, 32, 32), jnp.float32)).astype(jnp.complex64)
    cqi = jax.random.normal(kc, (T, B), jnp.float32)
    m = jax.random.normal(km, (T, B), jnp.float32)

    kv, vnext = atten_cell_forward(Q_c, cqi, m, kern_params)
    jax.block_until_ready((kv, vnext))

    assert kv.shape == (T, N_LAYERS, B, 2 * HID)
    assert vnext.shape == (T, B, HID)
    out0 = format_step(kv, vnext, 0)
    assert out0["Q_feature"].shape == (B, HID)
    assert out0["data"][0][0].shape == (B, 1, HID)
    assert out0["data"][0][1].shape == (B, 1, HID)

    # correctness check vs. the f32 reference (bf16 matmul operands -> loose tol)
    for t in range(T):
        ref_data, ref_x = reference_forward(Q_c[t], cqi[t], m[t], raw_params)
        np.testing.assert_allclose(np.asarray(vnext[t]), np.asarray(ref_x),
                                   rtol=5e-2, atol=5e-2)
        np.testing.assert_allclose(np.asarray(kv[t, 0, :, :HID]),
                                   np.asarray(ref_data[0][0][:, 0, :]),
                                   rtol=5e-2, atol=5e-2)
        np.testing.assert_allclose(np.asarray(kv[t, 0, :, HID:]),
                                   np.asarray(ref_data[0][1][:, 0, :]),
                                   rtol=5e-2, atol=5e-2)

    print("KERNEL_OK")
</pallas_src>

<mosaic_0001>
module attributes {stable_mosaic.version = 11 : i64} {
  func.func @fused_kernel(%arg0: i32, %arg1: memref<1x8x2176xbf16, #tpu.memory_space<vmem>>, %arg2: memref<2176x128xbf16, #tpu.memory_space<vmem>>, %arg3: memref<1x128x640xbf16, #tpu.memory_space<vmem>>, %arg4: memref<16x128xf32, #tpu.memory_space<vmem>>, %arg5: memref<1x1x8x256xf32, #tpu.memory_space<vmem>>, %arg6: memref<1x8x128xf32, #tpu.memory_space<vmem>>) attributes {dimension_semantics = [#tpu.dimension_semantics<parallel>], iteration_bounds = array<i64: 4>, scalar_prefetch = 0 : i64, scratch_operands = 0 : i64, tpu.core_type = #tpu.core_type<tc>, window_params = [{transform_indices = @transform_0, window_bounds = array<i64: 1, 8, 2176>}, {pipeline_mode = #tpu.pipeline_mode<synchronous>, transform_indices = @transform_1, window_bounds = array<i64: 2176, 128>}, {pipeline_mode = #tpu.pipeline_mode<synchronous>, transform_indices = @transform_2, window_bounds = array<i64: 1, 128, 640>}, {pipeline_mode = #tpu.pipeline_mode<synchronous>, transform_indices = @transform_3, window_bounds = array<i64: 16, 128>}, {transform_indices = @transform_4, window_bounds = array<i64: 1, 1, 8, 256>}, {transform_indices = @transform_5, window_bounds = array<i64: 1, 8, 128>}]} {
    %c0 = arith.constant 0 : index
    %c0_0 = arith.constant 0 : index
    %c0_1 = arith.constant 0 : index
    %0 = vector.load %arg1[%c0, %c0_0, %c0_1] : memref<1x8x2176xbf16, #tpu.memory_space<vmem>>, vector<1x8x2176xbf16>
    %1 = vector.shape_cast %0 : vector<1x8x2176xbf16> to vector<8x2176xbf16>
    %c0_2 = arith.constant 0 : index
    %c0_3 = arith.constant 0 : index
    %2 = vector.load %arg2[%c0_2, %c0_3] : memref<2176x128xbf16, #tpu.memory_space<vmem>>, vector<2176x128xbf16>
    %cst = arith.constant dense<0.000000e+00> : vector<8x128xf32>
    %3 = tpu.matmul %1, %2, %cst {dimension_numbers = #tpu.dot_dimension_numbers<[1], [0], [0], [1], [0, 0, 1, 1], [], []>} : vector<8x2176xbf16>, vector<2176x128xbf16>, vector<8x128xf32> -> vector<8x128xf32>
    %c0_4 = arith.constant 0 : index
    %c0_5 = arith.constant 0 : index
    %4 = vector.load %arg4[%c0_4, %c0_5] : memref<16x128xf32, #tpu.memory_space<vmem>>, vector<1x128xf32>
    %5 = vector.broadcast %4 : vector<1x128xf32> to vector<8x128xf32>
    %6 = arith.addf %3, %5 : vector<8x128xf32>
    %c1 = arith.constant 1 : index
    %c0_6 = arith.constant 0 : index
    %7 = vector.load %arg4[%c1, %c0_6] : memref<16x128xf32, #tpu.memory_space<vmem>>, vector<1x128xf32>
    %c2 = arith.constant 2 : index
    %c0_7 = arith.constant 0 : index
    %8 = vector.load %arg4[%c2, %c0_7] : memref<16x128xf32, #tpu.memory_space<vmem>>, vector<1x128xf32>
    %cst_8 = arith.constant dense<0.000000e+00> : vector<8xf32>
    %9 = vector.multi_reduction <add>, %6, %cst_8 [1] : vector<8x128xf32> to vector<8xf32>
    %10 = vector.shape_cast %9 : vector<8xf32> to vector<8x1xf32>
    %cst_9 = arith.constant 1.280000e+02 : f32
    %11 = vector.broadcast %cst_9 : f32 to vector<8x1xf32>
    %12 = arith.divf %10, %11 : vector<8x1xf32>
    %13 = vector.broadcast %12 : vector<8x1xf32> to vector<8x128xf32>
    %14 = arith.subf %6, %13 : vector<8x128xf32>
    %15 = arith.mulf %14, %14 : vector<8x128xf32>
    %cst_10 = arith.constant dense<0.000000e+00> : vector<8xf32>
    %16 = vector.multi_reduction <add>, %15, %cst_10 [1] : vector<8x128xf32> to vector<8xf32>
    %17 = vector.shape_cast %16 : vector<8xf32> to vector<8x1xf32>
    %cst_11 = arith.constant 1.280000e+02 : f32
    %18 = vector.broadcast %cst_11 : f32 to vector<8x1xf32>
    %19 = arith.divf %17, %18 : vector<8x1xf32>
    %cst_12 = arith.constant 9.99999974E-6 : f32
    %20 = vector.broadcast %cst_12 : f32 to vector<8x1xf32>
    %21 = arith.addf %19, %20 : vector<8x1xf32>
    %22 = math.rsqrt %21 : vector<8x1xf32>
    %23 = vector.broadcast %22 : vector<8x1xf32> to vector<8x128xf32>
    %24 = arith.mulf %14, %23 : vector<8x128xf32>
    %25 = vector.broadcast %7 : vector<1x128xf32> to vector<8x128xf32>
    %26 = arith.mulf %24, %25 : vector<8x128xf32>
    %27 = vector.broadcast %8 : vector<1x128xf32> to vector<8x128xf32>
    %28 = arith.addf %26, %27 : vector<8x128xf32>
    %29 = arith.truncf %28 : vector<8x128xf32> to vector<8x128xbf16>
    %c0_13 = arith.constant 0 : index
    %c0_14 = arith.constant 0 : index
    %c0_15 = arith.constant 0 : index
    %30 = vector.load %arg3[%c0_13, %c0_14, %c0_15] : memref<1x128x640xbf16, #tpu.memory_space<vmem>>, vector<1x128x384xbf16>
    %31 = vector.shape_cast %30 : vector<1x128x384xbf16> to vector<128x384xbf16>
    %cst_16 = arith.constant dense<0.000000e+00> : vector<8x384xf32>
    %32 = tpu.matmul %29, %31, %cst_16 {dimension_numbers = #tpu.dot_dimension_numbers<[1], [0], [0], [1], [0, 0, 1, 1], [], []>} : vector<8x128xbf16>, vector<128x384xbf16>, vector<8x384xf32> -> vector<8x384xf32>
    %33 = vector.extract_strided_slice %32 {offsets = [0, 0], sizes = [8, 128], strides = [1, 1]} : vector<8x384xf32> to vector<8x128xf32>
    %c3 = arith.constant 3 : index
    %c0_17 = arith.constant 0 : index
    %34 = vector.load %arg4[%c3, %c0_17] : memref<16x128xf32, #tpu.memory_space<vmem>>, vector<1x128xf32>
    %35 = vector.broadcast %34 : vector<1x128xf32> to vector<8x128xf32>
    %36 = arith.addf %33, %35 : vector<8x128xf32>
    %37 = vector.extract_strided_slice %32 {offsets = [0, 128], sizes = [8, 128], strides = [1, 1]} : vector<8x384xf32> to vector<8x128xf32>
    %c4 = arith.constant 4 : index
    %c0_18 = arith.constant 0 : index
    %38 = vector.load %arg4[%c4, %c0_18] : memref<16x128xf32, #tpu.memory_space<vmem>>, vector<1x128xf32>
    %39 = vector.broadcast %38 : vector<1x128xf32> to vector<8x128xf32>
    %40 = arith.addf %37, %39 : vector<8x128xf32>
    %41 = vector.extract_strided_slice %32 {offsets = [0, 256], sizes = [8, 128], strides = [1, 1]} : vector<8x384xf32> to vector<8x128xf32>
    %c5 = arith.constant 5 : index
    %c0_19 = arith.constant 0 : index
    %42 = vector.load %arg4[%c5, %c0_19] : memref<16x128xf32, #tpu.memory_space<vmem>>, vector<1x128xf32>
    %43 = vector.broadcast %42 : vector<1x128xf32> to vector<8x128xf32>
    %44 = arith.addf %41, %43 : vector<8x128xf32>
    %45 = tpu.concatenate %36, %40 in 1 : vector<8x128xf32>, vector<8x128xf32> -> vector<8x256xf32>
    %c0_20 = arith.constant 0 : index
    %c0_21 = arith.constant 0 : index
    %c0_22 = arith.constant 0 : index
    %c0_23 = arith.constant 0 : index
    %46 = vector.load %arg5[%c0_20, %c0_21, %c0_22, %c0_23] : memref<1x1x8x256xf32, #tpu.memory_space<vmem>>, vector<1x1x8x256xf32>
    %47 = vector.shape_cast %46 : vector<1x1x8x256xf32> to vector<8x256xf32>
    %48 = vector.shape_cast %45 : vector<8x256xf32> to vector<1x1x8x256xf32>
    tpu.vector_store %arg5[%c0_20, %c0_21, %c0_22, %c0_23], %48 {strides = array<i32>} : memref<1x1x8x256xf32, #tpu.memory_space<vmem>>, vector<1x1x8x256xf32>,
    %49 = arith.addf %6, %44 : vector<8x128xf32>
    %c6 = arith.constant 6 : index
    %c0_24 = arith.constant 0 : index
    %50 = vector.load %arg4[%c6, %c0_24] : memref<16x128xf32, #tpu.memory_space<vmem>>, vector<1x128xf32>
    %c7 = arith.constant 7 : index
    %c0_25 = arith.constant 0 : index
    %51 = vector.load %arg4[%c7, %c0_25] : memref<16x128xf32, #tpu.memory_space<vmem>>, vector<1x128xf32>
    %cst_26 = arith.constant dense<0.000000e+00> : vector<8xf32>
    %52 = vector.multi_reduction <add>, %49, %cst_26 [1] : vector<8x128xf32> to vector<8xf32>
    %53 = vector.shape_cast %52 : vector<8xf32> to vector<8x1xf32>
    %cst_27 = arith.constant 1.280000e+02 : f32
    %54 = vector.broadcast %cst_27 : f32 to vector<8x1xf32>
    %55 = arith.divf %53, %54 : vector<8x1xf32>
    %56 = vector.broadcast %55 : vector<8x1xf32> to vector<8x128xf32>
    %57 = arith.subf %49, %56 : vector<8x128xf32>
    %58 = arith.mulf %57, %57 : vector<8x128xf32>
    %cst_28 = arith.constant dense<0.000000e+00> : vector<8xf32>
    %59 = vector.multi_reduction <add>, %58, %cst_28 [1] : vector<8x128xf32> to vector<8xf32>
    %60 = vector.shape_cast %59 : vector<8xf32> to vector<8x1xf32>
    %cst_29 = arith.constant 1.280000e+02 : f32
    %61 = vector.broadcast %cst_29 : f32 to vector<8x1xf32>
    %62 = arith.divf %60, %61 : vector<8x1xf32>
    %cst_30 = arith.constant 9.99999974E-6 : f32
    %63 = vector.broadcast %cst_30 : f32 to vector<8x1xf32>
    %64 = arith.addf %62, %63 : vector<8x1xf32>
    %65 = math.rsqrt %64 : vector<8x1xf32>
    %66 = vector.broadcast %65 : vector<8x1xf32> to vector<8x128xf32>
    %67 = arith.mulf %57, %66 : vector<8x128xf32>
    %68 = vector.broadcast %50 : vector<1x128xf32> to vector<8x128xf32>
    %69 = arith.mulf %67, %68 : vector<8x128xf32>
    %70 = vector.broadcast %51 : vector<1x128xf32> to vector<8x128xf32>
    %71 = arith.addf %69, %70 : vector<8x128xf32>
    %72 = arith.truncf %71 : vector<8x128xf32> to vector<8x128xbf16>
    %c0_31 = arith.constant 0 : index
    %c0_32 = arith.constant 0 : index
    %c384 = arith.constant 384 : index
    %73 = vector.load %arg3[%c0_31, %c0_32, %c384] : memref<1x128x640xbf16, #tpu.memory_space<vmem>>, vector<1x128x128xbf16>
    %74 = vector.shape_cast %73 : vector<1x128x128xbf16> to vector<128x128xbf16>
    %cst_33 = arith.constant dense<0.000000e+00> : vector<8x128xf32>
    %75 = tpu.matmul %72, %74, %cst_33 {dimension_numbers = #tpu.dot_dimension_numbers<[1], [0], [0], [1], [0, 0, 1, 1], [], []>} : vector<8x128xbf16>, vector<128x128xbf16>, vector<8x128xf32> -> vector<8x128xf32>
    %c8 = arith.constant 8 : index
    %c0_34 = arith.constant 0 : index
    %76 = vector.load %arg4[%c8, %c0_34] : memref<16x128xf32, #tpu.memory_space<vmem>>, vector<1x128xf32>
    %77 = vector.broadcast %76 : vector<1x128xf32> to vector<8x128xf32>
    %78 = arith.addf %75, %77 : vector<8x128xf32>
    %cst_35 = arith.constant 5.000000e-01 : f32
    %79 = vector.broadcast %cst_35 : f32 to vector<8x128xf32>
    %80 = arith.mulf %79, %78 : vector<8x128xf32>
    %cst_36 = arith.constant 4.471500e-02 : f32
    %81 = vector.broadcast %cst_36 : f32 to vector<8x128xf32>
    %82 = arith.mulf %81, %78 : vector<8x128xf32>
    %83 = arith.mulf %82, %78 : vector<8x128xf32>
    %84 = arith.mulf %83, %78 : vector<8x128xf32>
    %85 = arith.addf %78, %84 : vector<8x128xf32>
    %cst_37 = arith.constant 0.797884583 : f32
    %86 = vector.broadcast %cst_37 : f32 to vector<8x128xf32>
    %87 = arith.mulf %86, %85 : vector<8x128xf32>
    %88 = math.tanh %87 : vector<8x128xf32>
    %cst_38 = arith.constant 1.000000e+00 : f32
    %89 = vector.broadcast %cst_38 : f32 to vector<8x128xf32>
    %90 = arith.addf %89, %88 : vector<8x128xf32>
    %91 = arith.mulf %80, %90 : vector<8x128xf32>
    %92 = arith.truncf %91 : vector<8x128xf32> to vector<8x128xbf16>
    %c0_39 = arith.constant 0 : index
    %c0_40 = arith.constant 0 : index
    %c512 = arith.constant 512 : index
    %93 = vector.load %arg3[%c0_39, %c0_40, %c512] : memref<1x128x640xbf16, #tpu.memory_space<vmem>>, vector<1x128x128xbf16>
    %94 = vector.shape_cast %93 : vector<1x128x128xbf16> to vector<128x128xbf16>
    %cst_41 = arith.constant dense<0.000000e+00> : vector<8x128xf32>
    %95 = tpu.matmul %92, %94, %cst_41 {dimension_numbers = #tpu.dot_dimension_numbers<[1], [0], [0], [1], [0, 0, 1, 1], [], []>} : vector<8x128xbf16>, vector<128x128xbf16>, vector<8x128xf32> -> vector<8x128xf32>
    %c9 = arith.constant 9 : index
    %c0_42 = arith.constant 0 : index
    %96 = vector.load %arg4[%c9, %c0_42] : memref<16x128xf32, #tpu.memory_space<vmem>>, vector<1x128xf32>
    %97 = vector.broadcast %96 : vector<1x128xf32> to vector<8x128xf32>
    %98 = arith.addf %95, %97 : vector<8x128xf32>
    %99 = arith.addf %49, %98 : vector<8x128xf32>
    %c0_43 = arith.constant 0 : index
    %c0_44 = arith.constant 0 : index
    %c0_45 = arith.constant 0 : index
    %100 = vector.load %arg6[%c0_43, %c0_44, %c0_45] : memref<1x8x128xf32, #tpu.memory_space<vmem>>, vector<1x8x128xf32>
    %101 = vector.shape_cast %100 : vector<1x8x128xf32> to vector<8x128xf32>
    %102 = vector.shape_cast %99 : vector<8x128xf32> to vector<1x8x128xf32>
    tpu.vector_store %arg6[%c0_43, %c0_44, %c0_45], %102 {strides = array<i32>} : memref<1x8x128xf32, #tpu.memory_space<vmem>>, vector<1x8x128xf32>,
    return
  }
  func.func @transform_0(%arg0: i32) -> (i32, i32, i32) {
    %c0_i32 = arith.constant 0 : i32
    %c0_i32_0 = arith.constant 0 : i32
    %c0_i32_1 = arith.constant 0 : i32
    return %arg0, %c0_i32, %c0_i32_0 : i32, i32, i32
  }
  func.func @transform_1(%arg0: i32) -> (i32, i32) {
    %c0_i32 = arith.constant 0 : i32
    %c0_i32_0 = arith.constant 0 : i32
    %c0_i32_1 = arith.constant 0 : i32
    return %c0_i32, %c0_i32_0 : i32, i32
  }
  func.func @transform_2(%arg0: i32) -> (i32, i32, i32) {
    %c0_i32 = arith.constant 0 : i32
    %c0_i32_0 = arith.constant 0 : i32
    %c0_i32_1 = arith.constant 0 : i32
    %c0_i32_2 = arith.constant 0 : i32
    return %c0_i32, %c0_i32_0, %c0_i32_1 : i32, i32, i32
  }
  func.func @transform_3(%arg0: i32) -> (i32, i32) {
    %c0_i32 = arith.constant 0 : i32
    %c0_i32_0 = arith.constant 0 : i32
    %c0_i32_1 = arith.constant 0 : i32
    return %c0_i32, %c0_i32_0 : i32, i32
  }
  func.func @transform_4(%arg0: i32) -> (i32, i32, i32, i32) {
    %c0_i32 = arith.constant 0 : i32
    %c0_i32_0 = arith.constant 0 : i32
    %c0_i32_1 = arith.constant 0 : i32
    %c0_i32_2 = arith.constant 0 : i32
    return %arg0, %c0_i32, %c0_i32_0, %c0_i32_1 : i32, i32, i32, i32
  }
  func.func @transform_5(%arg0: i32) -> (i32, i32, i32) {
    %c0_i32 = arith.constant 0 : i32
    %c0_i32_0 = arith.constant 0 : i32
    %c0_i32_1 = arith.constant 0 : i32
    return %arg0, %c0_i32, %c0_i32_0 : i32, i32, i32
  }
}

</mosaic_0001>

<llo_original>
// kernel: custom-call
$region0: #{custom-call}
  %s0 = inlined_call_operand.hbm [shape: c64[4,8,32,32], index: 0, kind: input, shape index: {}]
  %s1 = inlined_call_operand.vmem [shape: f32[4,8,32,32], index: 1, kind: output, shape index: {}]
  $region1: #{custom-call} parent=0
    #allocation0 [shape = 's32[1]{0}', space=sflag, size = 0x4, scoped, tag = 'scoped memory for custom-call']
    %2 = vsyncpa [#allocation0], 0
    %s3 = sshll.u32 %s1, 4
    %s4 = int_to_ptr.vmem [resolvable:$true] %s3
    %6 = dma.hbm_to_vmem [thread:$0]  %s0, 16384, %s4, [#allocation0]
    %7 = dma.done [#allocation0], 16384
    %8 = vsyncpa [#allocation0], 1

// kernel: custom-call.1
$region0: #{custom-call.1}
  %s0 = inlined_call_operand.hbm [shape: c64[4,8,32,32], index: 0, kind: input, shape index: {}]
  %s1 = inlined_call_operand.vmem [shape: f32[4,8,32,32], index: 1, kind: output, shape index: {}]
  %s2 = scalar_lea.hbm %s0, 16384
  $region1: #{custom-call.1} parent=0
    #allocation0 [shape = 's32[1]{0}', space=sflag, size = 0x4, scoped, tag = 'scoped memory for custom-call.1']
    %3 = vsyncpa [#allocation0], 0
    %s4 = sshll.u32 %s1, 4
    %s5 = int_to_ptr.vmem [resolvable:$true] %s4
    %7 = dma.hbm_to_vmem [thread:$0]  %s2, 16384, %s5, [#allocation0]
    %8 = dma.done [#allocation0], 16384
    %9 = vsyncpa [#allocation0], 1

// kernel: atten_cell_forward.1
$region0: #{atten_cell_forward.1}
  #allocation0 [shape = 'u32[]', space=smem, size = 0x4, offset = 0x4, fixed_abs, tag = 'smem constant byte address 0x4 - core index']
  #allocation1 [shape = 'u32[144,128]{1,0:T(1,128)}', space=vmem, size = 0x12000, scoped, tag = 'internal scratch']
  %s0 = inlined_call_operand.vmem [shape: bf16[4,8,2176], index: 0, kind: input, shape index: {}]
  %s1 = inlined_call_operand.vmem [shape: bf16[2176,128], index: 1, kind: input, shape index: {}]
  %s2 = inlined_call_operand.vmem [shape: bf16[1,128,640], index: 2, kind: input, shape index: {}]
  %s3 = inlined_call_operand.vmem [shape: f32[16,128], index: 3, kind: input, shape index: {}]
  %s4 = inlined_call_operand.hbm [shape: f32[4,1,8,256], index: 4, kind: output, shape index: {0}]
  %s5 = inlined_call_operand.hbm [shape: f32[4,8,128], index: 5, kind: output, shape index: {1}]
  %6 = xla_tuple %s4, %s5
  %s7 = sld [smem:[#allocation0]]
  $region57: #{atten_cell_forward.1} parent=0
    _
  %s9 = ssub.s32 1, %s7
  %s10 = scalar_select 0, %s9, %s7
  $region1: #{atten_cell_forward.1} parent=0
    #allocation2 [shape = 'u8[16384]{0}', space=vmem, size = 0x4000, scoped, tag = 'output window, operand 0']
    #allocation3 [shape = 's32[2]{0}', space=sflag, size = 0x8, scoped, tag = 'scoped memory for atten_cell_forward.1']
    #allocation4 [shape = 'u8[8192]{0}', space=vmem, size = 0x2000, scoped, tag = 'output window, operand 1']
    #allocation5 [shape = 's32[2]{0}', space=sflag, size = 0x8, scoped, tag = 'scoped memory for atten_cell_forward.1']
    %11 = vsyncpa [#allocation3], 0
    %s12 = scalar_lea.sflag [#allocation3], 1
    %13 = vsyncpa %s12, 0
    %14 = vsyncpa [#allocation5], 0
    %s15 = scalar_lea.sflag [#allocation5], 1
    %16 = vsyncpa %s15, 0
    loop: start=0, step=1, limit=6
    $region2: #{atten_cell_forward.1} parent=1 // loop_pre_header
      _
    $region3: #{atten_cell_forward.1} parent=1 // loop_header
      %s18 = sphi 0, %s22
      %p19 = scmp.ge.s32.totalorder %s18, 6
      %s28 = sphi 0, %s30
      %s31 = sphi 0, %s28
      %s32 = sphi 0, %s31
      %s48 = sphi 0, %s32
      %s52 = sphi 0, %s52
      %s54 = sphi 0, %s52
      %s55 = sphi 0, %s54
      %s69 = sphi 0, %s55
      %s73 = sphi 0, %s73
      %s75 = sphi 0, %s73
      %s76 = sphi 0, %s75
      %s90 = sphi 0, %s76
      %s94 = sphi 0, %s94
      %s96 = sphi 0, %s94
      %s97 = sphi 0, %s96
      %s111 = sphi 0, %s97
      %s117 = sphi 0, %s119
      %s120 = sphi 0, %s117
      %s121 = sphi 0, %s120
      %s137 = sphi 0, %s121
      %s143 = sphi 0, %s145
      %s146 = sphi 0, %s143
      %s147 = sphi 0, %s146
      %s163 = sphi 0, %s147
    $region4: #{atten_cell_forward.1} parent=1 // loop_header_branch
      %21 = sbr.rel (%p19) target = $region8
    $region5: #{atten_cell_forward.1} parent=1 // loop_body
      %s23 = ssub.s32 %s18, 1
      %s24 = ssub.s32 %s18, 2
      %s25 = sadd.s32 %s18, 1
      %s26 = ssub.s32 %s18, %s25
      %p27 = scmp.eq.s32.totalorder %s26, 0
      %s29 = sadd.s32 %s28, 1
      %s30 = scalar_select %p27, %s28, %s29
      %p33 = pneg %p27
      %p34 = scmp.eq.s32.totalorder %s18, 3
      %p35 = por %p33, %p34
      %p36 = scmp.ne.s32.totalorder %s28, %s31
      %p37 = scmp.eq.s32.totalorder %s18, 0
      %p38 = por %p36, %p37
      %p39 = scmp.ne.s32.totalorder %s28, %s31
      %p40 = scmp.eq.s32.totalorder %s23, 3
      %p41 = por %p39, %p40
      %p42 = scmp.ne.s32.totalorder %s31, %s32
      %p43 = scmp.eq.s32.totalorder %s23, 0
      %p44 = por %p42, %p43
      %p45 = scmp.ne.s32.totalorder %s31, %s32
      %p46 = scmp.eq.s32.totalorder %s24, 3
      %p47 = por %p45, %p46
      %p49 = scmp.ne.s32.totalorder %s32, %s48
      %p50 = scmp.eq.s32.totalorder %s24, 0
      %p51 = por %p49, %p50
      %s53 = sadd.s32 %s52, 1
      %p56 = scmp.eq.s32.totalorder %s18, 3
      %p57 = scmp.ne.s32.totalorder %s52, %s54
      %p58 = scmp.eq.s32.totalorder %s18, 0
      %p59 = por %p57, %p58
      %p60 = scmp.ne.s32.totalorder %s52, %s54
      %p61 = scmp.eq.s32.totalorder %s23, 3
      %p62 = por %p60, %p61
      %p63 = scmp.ne.s32.totalorder %s54, %s55
      %p64 = scmp.eq.s32.totalorder %s23, 0
      %p65 = por %p63, %p64
      %p66 = scmp.ne.s32.totalorder %s54, %s55
      %p67 = scmp.eq.s32.totalorder %s24, 3
      %p68 = por %p66, %p67
      %p70 = scmp.ne.s32.totalorder %s55, %s69
      %p71 = scmp.eq.s32.totalorder %s24, 0
      %p72 = por %p70, %p71
      %s74 = sadd.s32 %s73, 1
      %p77 = scmp.eq.s32.totalorder %s18, 3
      %p78 = scmp.ne.s32.totalorder %s73, %s75
      %p79 = scmp.eq.s32.totalorder %s18, 0
      %p80 = por %p78, %p79
      %p81 = scmp.ne.s32.totalorder %s73, %s75
      %p82 = scmp.eq.s32.totalorder %s23, 3
      %p83 = por %p81, %p82
      %p84 = scmp.ne.s32.totalorder %s75, %s76
      %p85 = scmp.eq.s32.totalorder %s23, 0
      %p86 = por %p84, %p85
      %p87 = scmp.ne.s32.totalorder %s75, %s76
      %p88 = scmp.eq.s32.totalorder %s24, 3
      %p89 = por %p87, %p88
      %p91 = scmp.ne.s32.totalorder %s76, %s90
      %p92 = scmp.eq.s32.totalorder %s24, 0
      %p93 = por %p91, %p92
      %s95 = sadd.s32 %s94, 1
      %p98 = scmp.eq.s32.totalorder %s18, 3
      %p99 = scmp.ne.s32.totalorder %s94, %s96
      %p100 = scmp.eq.s32.totalorder %s18, 0
      %p101 = por %p99, %p100
      %p102 = scmp.ne.s32.totalorder %s94, %s96
      %p103 = scmp.eq.s32.totalorder %s23, 3
      %p104 = por %p102, %p103
      %p105 = scmp.ne.s32.totalorder %s96, %s97
      %p106 = scmp.eq.s32.totalorder %s23, 0
      %p107 = por %p105, %p106
      %p108 = scmp.ne.s32.totalorder %s96, %s97
      %p109 = scmp.eq.s32.totalorder %s24, 3
      %p110 = por %p108, %p109
      %p112 = scmp.ne.s32.totalorder %s97, %s111
      %p113 = scmp.eq.s32.totalorder %s24, 0
      %p114 = por %p112, %p113
      %s115 = ssub.s32 %s18, %s25
      %p116 = scmp.eq.s32.totalorder %s115, 0
      %s118 = sadd.s32 %s117, 1
      %s119 = scalar_select %p116, %s117, %s118
      %p122 = pneg %p116
      %p123 = scmp.eq.s32.totalorder %s18, 3
      %p124 = por %p122, %p123
      %p125 = scmp.ne.s32.totalorder %s117, %s120
      %p126 = scmp.eq.s32.totalorder %s18, 0
      %p127 = por %p125, %p126
      %p128 = scmp.ne.s32.totalorder %s117, %s120
      %p129 = scmp.eq.s32.totalorder %s23, 3
      %p130 = por %p128, %p129
      %p131 = scmp.ne.s32.totalorder %s120, %s121
      %p132 = scmp.eq.s32.totalorder %s23, 0
      %p133 = por %p131, %p132
      %p134 = scmp.ne.s32.totalorder %s120, %s121
      %p135 = scmp.eq.s32.totalorder %s24, 3
      %p136 = por %p134, %p135
      %p138 = scmp.ne.s32.totalorder %s121, %s137
      %p139 = scmp.eq.s32.totalorder %s24, 0
      %p140 = por %p138, %p139
      %s141 = ssub.s32 %s18, %s25
      %p142 = scmp.eq.s32.totalorder %s141, 0
      %s144 = sadd.s32 %s143, 1
      %s145 = scalar_select %p142, %s143, %s144
      %p148 = pneg %p142
      %p149 = scmp.eq.s32.totalorder %s18, 3
      %p150 = por %p148, %p149
      %p151 = scmp.ne.s32.totalorder %s143, %s146
      %p152 = scmp.eq.s32.totalorder %s18, 0
      %p153 = por %p151, %p152
      %p154 = scmp.ne.s32.totalorder %s143, %s146
      %p155 = scmp.eq.s32.totalorder %s23, 3
      %p156 = por %p154, %p155
      %p157 = scmp.ne.s32.totalorder %s146, %s147
      %p158 = scmp.eq.s32.totalorder %s23, 0
      %p159 = por %p157, %p158
      %p160 = scmp.ne.s32.totalorder %s146, %s147
      %p161 = scmp.eq.s32.totalorder %s24, 3
      %p162 = por %p160, %p161
      %p164 = scmp.ne.s32.totalorder %s147, %s163
      %p165 = scmp.eq.s32.totalorder %s24, 0
      %p166 = por %p164, %p165
      %p167 = scmp.le.s32.totalorder 1, %s18
      %p168 = scmp.lt.s32.totalorder %s18, 5
      %p169 = pnand %p167, %p168
      %p170 = pneg %p169
      // Predicated region
      $region9: #{atten_cell_forward.1} parent=5 // pred_check
        _
      $region10: #{atten_cell_forward.1} parent=5 // pred_check_branch
        %172 = sbr.rel (%p169) target = $region12
      $region11: #{atten_cell_forward.1} parent=5 // pred_region
        %s173 = ssub.s32 %s18, 1
        // Predicated region
        $region13: #{atten_cell_forward.1} parent=11 // pred_check
          %p174 = pneg %p65
        $region14: #{atten_cell_forward.1} parent=11 // pred_check_branch
          %176 = sbr.rel (%p174) target = $region16
        $region15: #{atten_cell_forward.1} parent=11 // pred_region
          _
        $region16: #{atten_cell_forward.1} parent=11 // pred_fallthru
          _
        // Predicated region
        $region17: #{atten_cell_forward.1} parent=11 // pred_check
          %p177 = pneg %p86
        $region18: #{atten_cell_forward.1} parent=11 // pred_check_branch
          %179 = sbr.rel (%p177) target = $region20
        $region19: #{atten_cell_forward.1} parent=11 // pred_region
          _
        $region20: #{atten_cell_forward.1} parent=11 // pred_fallthru
          _
        // Predicated region
        $region21: #{atten_cell_forward.1} parent=11 // pred_check
          %p180 = pneg %p107
        $region22: #{atten_cell_forward.1} parent=11 // pred_check_branch
          %182 = sbr.rel (%p180) target = $region24
        $region23: #{atten_cell_forward.1} parent=11 // pred_region
          _
        $region24: #{atten_cell_forward.1} parent=11 // pred_fallthru
          _
      $region12: #{atten_cell_forward.1} parent=5 // pred_fallthru
        _
      %p183 = scmp.lt.s32.totalorder %s18, 4
      // Predicated region
      $region25: #{atten_cell_forward.1} parent=5 // pred_check
        %p184 = pneg %p183
      $region26: #{atten_cell_forward.1} parent=5 // pred_check_branch
        %186 = sbr.rel (%p184) target = $region28
      $region27: #{atten_cell_forward.1} parent=5 // pred_region
        // Predicated region
        $region29: #{atten_cell_forward.1} parent=27 // pred_check
          %p187 = pneg %p38
        $region30: #{atten_cell_forward.1} parent=27 // pred_check_branch
          %189 = sbr.rel (%p187) target = $region32
        $region31: #{atten_cell_forward.1} parent=27 // pred_region
          %p190 = scmp.lt.s32.totalorder %s18, 3
          %s191 = scalar_select %p190, %s18, 3
          %s192 = smul.addr %s191, 17
          %s193 = smul.addr %s192, 4
          %s194 = scalar_lea.vmem %s0, %s193
        $region32: #{atten_cell_forward.1} parent=27 // pred_fallthru
          _
      $region28: #{atten_cell_forward.1} parent=5 // pred_fallthru
        _
      %p195 = scmp.le.s32.totalorder 1, %s18
      %p196 = scmp.lt.s32.totalorder %s18, 5
      %p197 = pnand %p195, %p196
      %p198 = pneg %p197
      // Predicated region
      $region33: #{atten_cell_forward.1} parent=5 // pred_check
        _
      $region34: #{atten_cell_forward.1} parent=5 // pred_check_branch
        %200 = sbr.rel (%p197) target = $region36
      $region35: #{atten_cell_forward.1} parent=5 // pred_region
        %s201 = ssub.s32 %s18, 1
        %p202 = scmp.lt.s32.totalorder %s23, 3
        %s203 = scalar_select %p202, %s23, 3
        %s204 = smul.addr %s203, 17
        %s205 = smul.addr %s204, 4
        %s206 = scalar_lea.vmem %s0, %s205
        %p207 = pneg %p44
        %p208 = pneg %p41
        %p209 = pneg %p65
        %p210 = pneg %p62
        %p211 = pneg %p86
        %p212 = pneg %p83
        %p213 = pneg %p107
        %p214 = pneg %p104
        %p215 = pneg %p133
        %p216 = pneg %p130
        %s217 = sand.u32 %s120, 1
        %s218 = scalar_lea.sflag [#allocation3], %s217
        %s219 = sand.u32 %s120, 1
        %s220 = smul.addr %s219, 16
        %s221 = scalar_lea.vmem [#allocation2], %s220
        %p222 = pneg %p159
        %p223 = pneg %p156
        %s224 = sand.u32 %s146, 1
        %s225 = scalar_lea.sflag [#allocation5], %s224
        %s226 = sand.u32 %s146, 1
        %s227 = smul.addr %s226, 8
        %s228 = scalar_lea.vmem [#allocation4], %s227
        %p229 = scmp.lt.s32.totalorder %s23, 3
        %s230 = scalar_select %p229, %s23, 3
        %s231 = smul.addr %s230, 17
        %s232 = smul.addr %s231, 4
        %s233 = scalar_lea.vmem %s0, %s232
        %v235 = vld [vmem:[%s233] sm:$0xff]
        %v236 = vld [vmem:[%s233 + $0x8] sm:$0xff]
        %v237 = vld [vmem:[%s233 + $0x10] sm:$0xff]
        %v238 = vld [vmem:[%s233 + $0x18] sm:$0xff]
        %v239 = vld [vmem:[%s233 + $0x20] sm:$0xff]
        %v240 = vld [vmem:[%s233 + $0x28] sm:$0xff]
        %v241 = vld [vmem:[%s233 + $0x30] sm:$0xff]
        %v242 = vld [vmem:[%s233 + $0x38] sm:$0xff]
        %v243 = vld [vmem:[%s233 + $0x40] sm:$0xf]
        %v244 = vld [vmem:[%s1] sm:$0xf]
        %v245 = vld [vmem:[%s1 + $0x4] sm:$0xf]
        %v246 = vld [vmem:[%s1 + $0x8] sm:$0xf]
        %v247 = vld [vmem:[%s1 + $0xc] sm:$0xf]
        %v248 = vld [vmem:[%s1 + $0x10] sm:$0xf]
        %v249 = vld [vmem:[%s1 + $0x14] sm:$0xf]
        %v250 = vld [vmem:[%s1 + $0x18] sm:$0xf]
        %v251 = vld [vmem:[%s1 + $0x1c] sm:$0xf]
        %v252 = vld [vmem:[%s1 + $0x20] sm:$0xf]
        %v253 = vld [vmem:[%s1 + $0x24] sm:$0xf]
        %v254 = vld [vmem:[%s1 + $0x28] sm:$0xf]
        %v255 = vld [vmem:[%s1 + $0x2c] sm:$0xf]
        %v256 = vld [vmem:[%s1 + $0x30] sm:$0xf]
        %v257 = vld [vmem:[%s1 + $0x34] sm:$0xf]
        %v258 = vld [vmem:[%s1 + $0x38] sm:$0xf]
        %v259 = vld [vmem:[%s1 + $0x3c] sm:$0xf]
        %v260 = vld [vmem:[%s1 + $0x40] sm:$0xf]
        %v261 = vld [vmem:[%s1 + $0x44] sm:$0xf]
        %v262 = vld [vmem:[%s1 + $0x48] sm:$0xf]
        %v263 = vld [vmem:[%s1 + $0x4c] sm:$0xf]
        %v264 = vld [vmem:[%s1 + $0x50] sm:$0xf]
        %v265 = vld [vmem:[%s1 + $0x54] sm:$0xf]
        %v266 = vld [vmem:[%s1 + $0x58] sm:$0xf]
        %v267 = vld [vmem:[%s1 + $0x5c] sm:$0xf]
        %v268 = vld [vmem:[%s1 + $0x60] sm:$0xf]
        %v269 = vld [vmem:[%s1 + $0x64] sm:$0xf]
        %v270 = vld [vmem:[%s1 + $0x68] sm:$0xf]
        %v271 = vld [vmem:[%s1 + $0x6c] sm:$0xf]
        %v272 = vld [vmem:[%s1 + $0x70] sm:$0xf]
        %v273 = vld [vmem:[%s1 + $0x74] sm:$0xf]
        %v274 = vld [vmem:[%s1 + $0x78] sm:$0xf]
        %v275 = vld [vmem:[%s1 + $0x7c] sm:$0xf]
        %v276 = vld [vmem:[%s1 + $0x80] sm:$0xf]
        %v277 = vld [vmem:[%s1 + $0x84] sm:$0xf]
        %v278 = vld [vmem:[%s1 + $0x88] sm:$0xf]
        %v279 = vld [vmem:[%s1 + $0x8c] sm:$0xf]
        %v280 = vld [vmem:[%s1 + $0x90] sm:$0xf]
        %v281 = vld [vmem:[%s1 + $0x94] sm:$0xf]
        %v282 = vld [vmem:[%s1 + $0x98] sm:$0xf]
        %v283 = vld [vmem:[%s1 + $0x9c] sm:$0xf]
        %v284 = vld [vmem:[%s1 + $0xa0] sm:$0xf]
        %v285 = vld [vmem:[%s1 + $0xa4] sm:$0xf]
        %v286 = vld [vmem:[%s1 + $0xa8] sm:$0xf]
        %v287 = vld [vmem:[%s1 + $0xac] sm:$0xf]
        %v288 = vld [vmem:[%s1 + $0xb0] sm:$0xf]
        %v289 = vld [vmem:[%s1 + $0xb4] sm:$0xf]
        %v290 = vld [vmem:[%s1 + $0xb8] sm:$0xf]
        %v291 = vld [vmem:[%s1 + $0xbc] sm:$0xf]
        %v292 = vld [vmem:[%s1 + $0xc0] sm:$0xf]
        %v293 = vld [vmem:[%s1 + $0xc4] sm:$0xf]
        %v294 = vld [vmem:[%s1 + $0xc8] sm:$0xf]
        %v295 = vld [vmem:[%s1 + $0xcc] sm:$0xf]
        %v296 = vld [vmem:[%s1 + $0xd0] sm:$0xf]
        %v297 = vld [vmem:[%s1 + $0xd4] sm:$0xf]
        %v298 = vld [vmem:[%s1 + $0xd8] sm:$0xf]
        %v299 = vld [vmem:[%s1 + $0xdc] sm:$0xf]
        %v300 = vld [vmem:[%s1 + $0xe0] sm:$0xf]
        %v301 = vld [vmem:[%s1 + $0xe4] sm:$0xf]
        %v302 = vld [vmem:[%s1 + $0xe8] sm:$0xf]
        %v303 = vld [vmem:[%s1 + $0xec] sm:$0xf]
        %v304 = vld [vmem:[%s1 + $0xf0] sm:$0xf]
        %v305 = vld [vmem:[%s1 + $0xf4] sm:$0xf]
        %v306 = vld [vmem:[%s1 + $0xf8] sm:$0xf]
        %v307 = vld [vmem:[%s1 + $0xfc] sm:$0xf]
        %v308 = vld [vmem:[%s1 + $0x100] sm:$0xf]
        %v309 = vld [vmem:[%s1 + $0x104] sm:$0xf]
        %v310 = vld [vmem:[%s1 + $0x108] sm:$0xf]
        %v311 = vld [vmem:[%s1 + $0x10c] sm:$0xf]
        %v312 = vld [vmem:[%s1 + $0x110] sm:$0xf]
        %v313 = vld [vmem:[%s1 + $0x114] sm:$0xf]
        %v314 = vld [vmem:[%s1 + $0x118] sm:$0xf]
        %v315 = vld [vmem:[%s1 + $0x11c] sm:$0xf]
        %v316 = vld [vmem:[%s1 + $0x120] sm:$0xf]
        %v317 = vld [vmem:[%s1 + $0x124] sm:$0xf]
        %v318 = vld [vmem:[%s1 + $0x128] sm:$0xf]
        %v319 = vld [vmem:[%s1 + $0x12c] sm:$0xf]
        %v320 = vld [vmem:[%s1 + $0x130] sm:$0xf]
        %v321 = vld [vmem:[%s1 + $0x134] sm:$0xf]
        %v322 = vld [vmem:[%s1 + $0x138] sm:$0xf]
        %v323 = vld [vmem:[%s1 + $0x13c] sm:$0xf]
        %v324 = vld [vmem:[%s1 + $0x140] sm:$0xf]
        %v325 = vld [vmem:[%s1 + $0x144] sm:$0xf]
        %v326 = vld [vmem:[%s1 + $0x148] sm:$0xf]
        %v327 = vld [vmem:[%s1 + $0x14c] sm:$0xf]
        %v328 = vld [vmem:[%s1 + $0x150] sm:$0xf]
        %v329 = vld [vmem:[%s1 + $0x154] sm:$0xf]
        %v330 = vld [vmem:[%s1 + $0x158] sm:$0xf]
        %v331 = vld [vmem:[%s1 + $0x15c] sm:$0xf]
        %v332 = vld [vmem:[%s1 + $0x160] sm:$0xf]
        %v333 = vld [vmem:[%s1 + $0x164] sm:$0xf]
        %v334 = vld [vmem:[%s1 + $0x168] sm:$0xf]
        %v335 = vld [vmem:[%s1 + $0x16c] sm:$0xf]
        %v336 = vld [vmem:[%s1 + $0x170] sm:$0xf]
        %v337 = vld [vmem:[%s1 + $0x174] sm:$0xf]
        %v338 = vld [vmem:[%s1 + $0x178] sm:$0xf]
        %v339 = vld [vmem:[%s1 + $0x17c] sm:$0xf]
        %v340 = vld [vmem:[%s1 + $0x180] sm:$0xf]
        %v341 = vld [vmem:[%s1 + $0x184] sm:$0xf]
        %v342 = vld [vmem:[%s1 + $0x188] sm:$0xf]
        %v343 = vld [vmem:[%s1 + $0x18c] sm:$0xf]
        %v344 = vld [vmem:[%s1 + $0x190] sm:$0xf]
        %v345 = vld [vmem:[%s1 + $0x194] sm:$0xf]
        %v346 = vld [vmem:[%s1 + $0x198] sm:$0xf]
        %v347 = vld [vmem:[%s1 + $0x19c] sm:$0xf]
        %v348 = vld [vmem:[%s1 + $0x1a0] sm:$0xf]
        %v349 = vld [vmem:[%s1 + $0x1a4] sm:$0xf]
        %v350 = vld [vmem:[%s1 + $0x1a8] sm:$0xf]
        %v351 = vld [vmem:[%s1 + $0x1ac] sm:$0xf]
        %v352 = vld [vmem:[%s1 + $0x1b0] sm:$0xf]
        %v353 = vld [vmem:[%s1 + $0x1b4] sm:$0xf]
        %v354 = vld [vmem:[%s1 + $0x1b8] sm:$0xf]
        %v355 = vld [vmem:[%s1 + $0x1bc] sm:$0xf]
        %v356 = vld [vmem:[%s1 + $0x1c0] sm:$0xf]
        %v357 = vld [vmem:[%s1 + $0x1c4] sm:$0xf]
        %v358 = vld [vmem:[%s1 + $0x1c8] sm:$0xf]
        %v359 = vld [vmem:[%s1 + $0x1cc] sm:$0xf]
        %v360 = vld [vmem:[%s1 + $0x1d0] sm:$0xf]
        %v361 = vld [vmem:[%s1 + $0x1d4] sm:$0xf]
        %v362 = vld [vmem:[%s1 + $0x1d8] sm:$0xf]
        %v363 = vld [vmem:[%s1 + $0x1dc] sm:$0xf]
        %v364 = vld [vmem:[%s1 + $0x1e0] sm:$0xf]
        %v365 = vld [vmem:[%s1 + $0x1e4] sm:$0xf]
        %v366 = vld [vmem:[%s1 + $0x1e8] sm:$0xf]
        %v367 = vld [vmem:[%s1 + $0x1ec] sm:$0xf]
        %v368 = vld [vmem:[%s1 + $0x1f0] sm:$0xf]
        %v369 = vld [vmem:[%s1 + $0x1f4] sm:$0xf]
        %v370 = vld [vmem:[%s1 + $0x1f8] sm:$0xf]
        %v371 = vld [vmem:[%s1 + $0x1fc] sm:$0xf]
        %v372 = vld [vmem:[%s1 + $0x200] sm:$0xf]
        %v373 = vld [vmem:[%s1 + $0x204] sm:$0xf]
        %v374 = vld [vmem:[%s1 + $0x208] sm:$0xf]
        %v375 = vld [vmem:[%s1 + $0x20c] sm:$0xf]
        %v376 = vld [vmem:[%s1 + $0x210] sm:$0xf]
        %v377 = vld [vmem:[%s1 + $0x214] sm:$0xf]
        %v378 = vld [vmem:[%s1 + $0x218] sm:$0xf]
        %v379 = vld [vmem:[%s1 + $0x21c] sm:$0xf]
        %v380 = vld [vmem:[%s1 + $0x220] sm:$0xf]
        %v381 = vld [vmem:[%s1 + $0x224] sm:$0xf]
        %v382 = vld [vmem:[%s1 + $0x228] sm:$0xf]
        %v383 = vld [vmem:[%s1 + $0x22c] sm:$0xf]
        %v384 = vld [vmem:[%s1 + $0x230] sm:$0xf]
        %v385 = vld [vmem:[%s1 + $0x234] sm:$0xf]
        %v386 = vld [vmem:[%s1 + $0x238] sm:$0xf]
        %v387 = vld [vmem:[%s1 + $0x23c] sm:$0xf]
        %v388 = vld [vmem:[%s1 + $0x240] sm:$0xf]
        %v389 = vld [vmem:[%s1 + $0x244] sm:$0xf]
        %v390 = vld [vmem:[%s1 + $0x248] sm:$0xf]
        %v391 = vld [vmem:[%s1 + $0x24c] sm:$0xf]
        %v392 = vld [vmem:[%s1 + $0x250] sm:$0xf]
        %v393 = vld [vmem:[%s1 + $0x254] sm:$0xf]
        %v394 = vld [vmem:[%s1 + $0x258] sm:$0xf]
        %v395 = vld [vmem:[%s1 + $0x25c] sm:$0xf]
        %v396 = vld [vmem:[%s1 + $0x260] sm:$0xf]
        %v397 = vld [vmem:[%s1 + $0x264] sm:$0xf]
        %v398 = vld [vmem:[%s1 + $0x268] sm:$0xf]
        %v399 = vld [vmem:[%s1 + $0x26c] sm:$0xf]
        %v400 = vld [vmem:[%s1 + $0x270] sm:$0xf]
        %v401 = vld [vmem:[%s1 + $0x274] sm:$0xf]
        %v402 = vld [vmem:[%s1 + $0x278] sm:$0xf]
        %v403 = vld [vmem:[%s1 + $0x27c] sm:$0xf]
        %v404 = vld [vmem:[%s1 + $0x280] sm:$0xf]
        %v405 = vld [vmem:[%s1 + $0x284] sm:$0xf]
        %v406 = vld [vmem:[%s1 + $0x288] sm:$0xf]
        %v407 = vld [vmem:[%s1 + $0x28c] sm:$0xf]
        %v408 = vld [vmem:[%s1 + $0x290] sm:$0xf]
        %v409 = vld [vmem:[%s1 + $0x294] sm:$0xf]
        %v410 = vld [vmem:[%s1 + $0x298] sm:$0xf]
        %v411 = vld [vmem:[%s1 + $0x29c] sm:$0xf]
        %v412 = vld [vmem:[%s1 + $0x2a0] sm:$0xf]
        %v413 = vld [vmem:[%s1 + $0x2a4] sm:$0xf]
        %v414 = vld [vmem:[%s1 + $0x2a8] sm:$0xf]
        %v415 = vld [vmem:[%s1 + $0x2ac] sm:$0xf]
        %v416 = vld [vmem:[%s1 + $0x2b0] sm:$0xf]
        %v417 = vld [vmem:[%s1 + $0x2b4] sm:$0xf]
        %v418 = vld [vmem:[%s1 + $0x2b8] sm:$0xf]
        %v419 = vld [vmem:[%s1 + $0x2bc] sm:$0xf]
        %v420 = vld [vmem:[%s1 + $0x2c0] sm:$0xf]
        %v421 = vld [vmem:[%s1 + $0x2c4] sm:$0xf]
        %v422 = vld [vmem:[%s1 + $0x2c8] sm:$0xf]
        %v423 = vld [vmem:[%s1 + $0x2cc] sm:$0xf]
        %v424 = vld [vmem:[%s1 + $0x2d0] sm:$0xf]
        %v425 = vld [vmem:[%s1 + $0x2d4] sm:$0xf]
        %v426 = vld [vmem:[%s1 + $0x2d8] sm:$0xf]
        %v427 = vld [vmem:[%s1 + $0x2dc] sm:$0xf]
        %v428 = vld [vmem:[%s1 + $0x2e0] sm:$0xf]
        %v429 = vld [vmem:[%s1 + $0x2e4] sm:$0xf]
        %v430 = vld [vmem:[%s1 + $0x2e8] sm:$0xf]
        %v431 = vld [vmem:[%s1 + $0x2ec] sm:$0xf]
        %v432 = vld [vmem:[%s1 + $0x2f0] sm:$0xf]
        %v433 = vld [vmem:[%s1 + $0x2f4] sm:$0xf]
        %v434 = vld [vmem:[%s1 + $0x2f8] sm:$0xf]
        %v435 = vld [vmem:[%s1 + $0x2fc] sm:$0xf]
        %v436 = vld [vmem:[%s1 + $0x300] sm:$0xf]
        %v437 = vld [vmem:[%s1 + $0x304] sm:$0xf]
        %v438 = vld [vmem:[%s1 + $0x308] sm:$0xf]
        %v439 = vld [vmem:[%s1 + $0x30c] sm:$0xf]
        %v440 = vld [vmem:[%s1 + $0x310] sm:$0xf]
        %v441 = vld [vmem:[%s1 + $0x314] sm:$0xf]
        %v442 = vld [vmem:[%s1 + $0x318] sm:$0xf]
        %v443 = vld [vmem:[%s1 + $0x31c] sm:$0xf]
        %v444 = vld [vmem:[%s1 + $0x320] sm:$0xf]
        %v445 = vld [vmem:[%s1 + $0x324] sm:$0xf]
        %v446 = vld [vmem:[%s1 + $0x328] sm:$0xf]
        %v447 = vld [vmem:[%s1 + $0x32c] sm:$0xf]
        %v448 = vld [vmem:[%s1 + $0x330] sm:$0xf]
        %v449 = vld [vmem:[%s1 + $0x334] sm:$0xf]
        %v450 = vld [vmem:[%s1 + $0x338] sm:$0xf]
        %v451 = vld [vmem:[%s1 + $0x33c] sm:$0xf]
        %v452 = vld [vmem:[%s1 + $0x340] sm:$0xf]
        %v453 = vld [vmem:[%s1 + $0x344] sm:$0xf]
        %v454 = vld [vmem:[%s1 + $0x348] sm:$0xf]
        %v455 = vld [vmem:[%s1 + $0x34c] sm:$0xf]
        %v456 = vld [vmem:[%s1 + $0x350] sm:$0xf]
        %v457 = vld [vmem:[%s1 + $0x354] sm:$0xf]
        %v458 = vld [vmem:[%s1 + $0x358] sm:$0xf]
        %v459 = vld [vmem:[%s1 + $0x35c] sm:$0xf]
        %v460 = vld [vmem:[%s1 + $0x360] sm:$0xf]
        %v461 = vld [vmem:[%s1 + $0x364] sm:$0xf]
        %v462 = vld [vmem:[%s1 + $0x368] sm:$0xf]
        %v463 = vld [vmem:[%s1 + $0x36c] sm:$0xf]
        %v464 = vld [vmem:[%s1 + $0x370] sm:$0xf]
        %v465 = vld [vmem:[%s1 + $0x374] sm:$0xf]
        %v466 = vld [vmem:[%s1 + $0x378] sm:$0xf]
        %v467 = vld [vmem:[%s1 + $0x37c] sm:$0xf]
        %v468 = vld [vmem:[%s1 + $0x380] sm:$0xf]
        %v469 = vld [vmem:[%s1 + $0x384] sm:$0xf]
        %v470 = vld [vmem:[%s1 + $0x388] sm:$0xf]
        %v471 = vld [vmem:[%s1 + $0x38c] sm:$0xf]
        %v472 = vld [vmem:[%s1 + $0x390] sm:$0xf]
        %v473 = vld [vmem:[%s1 + $0x394] sm:$0xf]
        %v474 = vld [vmem:[%s1 + $0x398] sm:$0xf]
        %v475 = vld [vmem:[%s1 + $0x39c] sm:$0xf]
        %v476 = vld [vmem:[%s1 + $0x3a0] sm:$0xf]
        %v477 = vld [vmem:[%s1 + $0x3a4] sm:$0xf]
        %v478 = vld [vmem:[%s1 + $0x3a8] sm:$0xf]
        %v479 = vld [vmem:[%s1 + $0x3ac] sm:$0xf]
        %v480 = vld [vmem:[%s1 + $0x3b0] sm:$0xf]
        %v481 = vld [vmem:[%s1 + $0x3b4] sm:$0xf]
        %v482 = vld [vmem:[%s1 + $0x3b8] sm:$0xf]
        %v483 = vld [vmem:[%s1 + $0x3bc] sm:$0xf]
        %v484 = vld [vmem:[%s1 + $0x3c0] sm:$0xf]
        %v485 = vld [vmem:[%s1 + $0x3c4] sm:$0xf]
        %v486 = vld [vmem:[%s1 + $0x3c8] sm:$0xf]
        %v487 = vld [vmem:[%s1 + $0x3cc] sm:$0xf]
        %v488 = vld [vmem:[%s1 + $0x3d0] sm:$0xf]
        %v489 = vld [vmem:[%s1 + $0x3d4] sm:$0xf]
        %v490 = vld [vmem:[%s1 + $0x3d8] sm:$0xf]
        %v491 = vld [vmem:[%s1 + $0x3dc] sm:$0xf]
        %v492 = vld [vmem:[%s1 + $0x3e0] sm:$0xf]
        %v493 = vld [vmem:[%s1 + $0x3e4] sm:$0xf]
        %v494 = vld [vmem:[%s1 + $0x3e8] sm:$0xf]
        %v495 = vld [vmem:[%s1 + $0x3ec] sm:$0xf]
        %v496 = vld [vmem:[%s1 + $0x3f0] sm:$0xf]
        %v497 = vld [vmem:[%s1 + $0x3f4] sm:$0xf]
        %v498 = vld [vmem:[%s1 + $0x3f8] sm:$0xf]
        %v499 = vld [vmem:[%s1 + $0x3fc] sm:$0xf]
        %v500 = vld [vmem:[%s1 + $0x400] sm:$0xf]
        %v501 = vld [vmem:[%s1 + $0x404] sm:$0xf]
        %v502 = vld [vmem:[%s1 + $0x408] sm:$0xf]
        %v503 = vld [vmem:[%s1 + $0x40c] sm:$0xf]
        %v504 = vld [vmem:[%s1 + $0x410] sm:$0xf]
        %v505 = vld [vmem:[%s1 + $0x414] sm:$0xf]
        %v506 = vld [vmem:[%s1 + $0x418] sm:$0xf]
        %v507 = vld [vmem:[%s1 + $0x41c] sm:$0xf]
        %v508 = vld [vmem:[%s1 + $0x420] sm:$0xf]
        %v509 = vld [vmem:[%s1 + $0x424] sm:$0xf]
        %v510 = vld [vmem:[%s1 + $0x428] sm:$0xf]
        %v511 = vld [vmem:[%s1 + $0x42c] sm:$0xf]
        %v512 = vld [vmem:[%s1 + $0x430] sm:$0xf]
        %v513 = vld [vmem:[%s1 + $0x434] sm:$0xf]
        %v514 = vld [vmem:[%s1 + $0x438] sm:$0xf]
        %v515 = vld [vmem:[%s1 + $0x43c] sm:$0xf]
        %v516 = vld [vmem:[%s3] sm:$0x1]
        %v517 = vlaneseq
        %v518 = vshrl.u32 %v517, 7
        %v519 = vsub.s32 0, %v518
        %v520 = vrot.slane %v516, %v519
        %v530 = vunpack.c.l.b16 %v235
        %v531 = vunpack.c.h.b16 %v235
        %v532 = vunpack.c.l.b16 %v236
        %v533 = vunpack.c.h.b16 %v236
        %v534 = vunpack.c.l.b16 %v237
        %v535 = vunpack.c.h.b16 %v237
        %v536 = vunpack.c.l.b16 %v238
        %v537 = vunpack.c.h.b16 %v238
        %v538 = vunpack.c.l.b16 %v239
        %v539 = vunpack.c.h.b16 %v239
        %v540 = vunpack.c.l.b16 %v240
        %v541 = vunpack.c.h.b16 %v240
        %v542 = vunpack.c.l.b16 %v241
        %v543 = vunpack.c.h.b16 %v241
        %v544 = vunpack.c.l.b16 %v242
        %v545 = vunpack.c.h.b16 %v242
        %v546 = vunpack.c.l.b16 %v243
        %v547 = vpack.c.b16 %v530, %v530
        %v548 = vpack.c.b16 %v531, %v531
        %v549 = vpack.c.b16 %v532, %v532
        %v550 = vpack.c.b16 %v533, %v533
        %v551 = vpack.c.b16 %v534, %v534
        %v552 = vpack.c.b16 %v535, %v535
        %v553 = vpack.c.b16 %v536, %v536
        %v554 = vpack.c.b16 %v537, %v537
        %v555 = vpack.c.b16 %v538, %v538
        %v556 = vpack.c.b16 %v539, %v539
        %v557 = vpack.c.b16 %v540, %v540
        %v558 = vpack.c.b16 %v541, %v541
        %v559 = vpack.c.b16 %v542, %v542
        %v560 = vpack.c.b16 %v543, %v543
        %v561 = vpack.c.b16 %v544, %v544
        %v562 = vpack.c.b16 %v545, %v545
        %v563 = vpack.c.b16 %v546, %v546
        %v853 = vunpack.c.l.b16 %v244
        %v854 = vunpack.c.l.b16 %v245
        %v855 = vunpack.c.l.b16 %v246
        %v856 = vunpack.c.l.b16 %v247
        %v857 = vunpack.c.l.b16 %v248
        %v858 = vunpack.c.l.b16 %v249
        %v859 = vunpack.c.l.b16 %v250
        %v860 = vunpack.c.l.b16 %v251
        %v861 = vunpack.c.l.b16 %v252
        %v862 = vunpack.c.l.b16 %v253
        %v863 = vunpack.c.l.b16 %v254
        %v864 = vunpack.c.l.b16 %v255
        %v865 = vunpack.c.l.b16 %v256
        %v866 = vunpack.c.l.b16 %v257
        %v867 = vunpack.c.l.b16 %v258
        %v868 = vunpack.c.l.b16 %v259
        %v869 = vunpack.c.l.b16 %v260
        %v870 = vunpack.c.l.b16 %v261
        %v871 = vunpack.c.l.b16 %v262
        %v872 = vunpack.c.l.b16 %v263
        %v873 = vunpack.c.l.b16 %v264
        %v874 = vunpack.c.l.b16 %v265
        %v875 = vunpack.c.l.b16 %v266
        %v876 = vunpack.c.l.b16 %v267
        %v877 = vunpack.c.l.b16 %v268
        %v878 = vunpack.c.l.b16 %v269
        %v879 = vunpack.c.l.b16 %v270
        %v880 = vunpack.c.l.b16 %v271
        %v881 = vunpack.c.l.b16 %v272
        %v882 = vunpack.c.l.b16 %v273
        %v883 = vunpack.c.l.b16 %v274
        %v884 = vunpack.c.l.b16 %v275
        %v885 = vunpack.c.l.b16 %v276
        %v886 = vunpack.c.l.b16 %v277
        %v887 = vunpack.c.l.b16 %v278
        %v888 = vunpack.c.l.b16 %v279
        %v889 = vunpack.c.l.b16 %v280
        %v890 = vunpack.c.l.b16 %v281
        %v891 = vunpack.c.l.b16 %v282
        %v892 = vunpack.c.l.b16 %v283
        %v893 = vunpack.c.l.b16 %v284
        %v894 = vunpack.c.l.b16 %v285
        %v895 = vunpack.c.l.b16 %v286
        %v896 = vunpack.c.l.b16 %v287
        %v897 = vunpack.c.l.b16 %v288
        %v898 = vunpack.c.l.b16 %v289
        %v899 = vunpack.c.l.b16 %v290
        %v900 = vunpack.c.l.b16 %v291
        %v901 = vunpack.c.l.b16 %v292
        %v902 = vunpack.c.l.b16 %v293
        %v903 = vunpack.c.l.b16 %v294
        %v904 = vunpack.c.l.b16 %v295
        %v905 = vunpack.c.l.b16 %v296
        %v906 = vunpack.c.l.b16 %v297
        %v907 = vunpack.c.l.b16 %v298
        %v908 = vunpack.c.l.b16 %v299
        %v909 = vunpack.c.l.b16 %v300
        %v910 = vunpack.c.l.b16 %v301
        %v911 = vunpack.c.l.b16 %v302
        %v912 = vunpack.c.l.b16 %v303
        %v913 = vunpack.c.l.b16 %v304
        %v914 = vunpack.c.l.b16 %v305
        %v915 = vunpack.c.l.b16 %v306
        %v916 = vunpack.c.l.b16 %v307
        %v917 = vunpack.c.l.b16 %v308
        %v918 = vunpack.c.l.b16 %v309
        %v919 = vunpack.c.l.b16 %v310
        %v920 = vunpack.c.l.b16 %v311
        %v921 = vunpack.c.l.b16 %v312
        %v922 = vunpack.c.l.b16 %v313
        %v923 = vunpack.c.l.b16 %v314
        %v924 = vunpack.c.l.b16 %v315
        %v925 = vunpack.c.l.b16 %v316
        %v926 = vunpack.c.l.b16 %v317
        %v927 = vunpack.c.l.b16 %v318
        %v928 = vunpack.c.l.b16 %v319
        %v929 = vunpack.c.l.b16 %v320
        %v930 = vunpack.c.l.b16 %v321
        %v931 = vunpack.c.l.b16 %v322
        %v932 = vunpack.c.l.b16 %v323
        %v933 = vunpack.c.l.b16 %v324
        %v934 = vunpack.c.l.b16 %v325
        %v935 = vunpack.c.l.b16 %v326
        %v936 = vunpack.c.l.b16 %v327
        %v937 = vunpack.c.l.b16 %v328
        %v938 = vunpack.c.l.b16 %v329
        %v939 = vunpack.c.l.b16 %v330
        %v940 = vunpack.c.l.b16 %v331
        %v941 = vunpack.c.l.b16 %v332
        %v942 = vunpack.c.l.b16 %v333
        %v943 = vunpack.c.l.b16 %v334
        %v944 = vunpack.c.l.b16 %v335
        %v945 = vunpack.c.l.b16 %v336
        %v946 = vunpack.c.l.b16 %v337
        %v947 = vunpack.c.l.b16 %v338
        %v948 = vunpack.c.l.b16 %v339
        %v949 = vunpack.c.l.b16 %v340
        %v950 = vunpack.c.l.b16 %v341
        %v951 = vunpack.c.l.b16 %v342
        %v952 = vunpack.c.l.b16 %v343
        %v953 = vunpack.c.l.b16 %v344
        %v954 = vunpack.c.l.b16 %v345
        %v955 = vunpack.c.l.b16 %v346
        %v956 = vunpack.c.l.b16 %v347
        %v957 = vunpack.c.l.b16 %v348
        %v958 = vunpack.c.l.b16 %v349
        %v959 = vunpack.c.l.b16 %v350
        %v960 = vunpack.c.l.b16 %v351
        %v961 = vunpack.c.l.b16 %v352
        %v962 = vunpack.c.l.b16 %v353
        %v963 = vunpack.c.l.b16 %v354
        %v964 = vunpack.c.l.b16 %v355
        %v965 = vunpack.c.l.b16 %v356
        %v966 = vunpack.c.l.b16 %v357
        %v967 = vunpack.c.l.b16 %v358
        %v968 = vunpack.c.l.b16 %v359
        %v969 = vunpack.c.l.b16 %v360
        %v970 = vunpack.c.l.b16 %v361
        %v971 = vunpack.c.l.b16 %v362
        %v972 = vunpack.c.l.b16 %v363
        %v973 = vunpack.c.l.b16 %v364
        %v974 = vunpack.c.l.b16 %v365
        %v975 = vunpack.c.l.b16 %v366
        %v976 = vunpack.c.l.b16 %v367
        %v977 = vunpack.c.l.b16 %v368
        %v978 = vunpack.c.l.b16 %v369
        %v979 = vunpack.c.l.b16 %v370
        %v980 = vunpack.c.l.b16 %v371
        %v981 = vunpack.c.l.b16 %v372
        %v982 = vunpack.c.l.b16 %v373
        %v983 = vunpack.c.l.b16 %v374
        %v984 = vunpack.c.l.b16 %v375
        %v985 = vunpack.c.l.b16 %v376
        %v986 = vunpack.c.l.b16 %v377
        %v987 = vunpack.c.l.b16 %v378
        %v988 = vunpack.c.l.b16 %v379
        %v989 = vunpack.c.l.b16 %v380
        %v990 = vunpack.c.l.b16 %v381
        %v991 = vunpack.c.l.b16 %v382
        %v992 = vunpack.c.l.b16 %v383
        %v993 = vunpack.c.l.b16 %v384
        %v994 = vunpack.c.l.b16 %v385
        %v995 = vunpack.c.l.b16 %v386
        %v996 = vunpack.c.l.b16 %v387
        %v997 = vunpack.c.l.b16 %v388
        %v998 = vunpack.c.l.b16 %v389
        %v999 = vunpack.c.l.b16 %v390
        %v1000 = vunpack.c.l.b16 %v391
        %v1001 = vunpack.c.l.b16 %v392
        %v1002 = vunpack.c.l.b16 %v393
        %v1003 = vunpack.c.l.b16 %v394
        %v1004 = vunpack.c.l.b16 %v395
        %v1005 = vunpack.c.l.b16 %v396
        %v1006 = vunpack.c.l.b16 %v397
        %v1007 = vunpack.c.l.b16 %v398
        %v1008 = vunpack.c.l.b16 %v399
        %v1009 = vunpack.c.l.b16 %v400
        %v1010 = vunpack.c.l.b16 %v401
        %v1011 = vunpack.c.l.b16 %v402
        %v1012 = vunpack.c.l.b16 %v403
        %v1013 = vunpack.c.l.b16 %v404
        %v1014 = vunpack.c.l.b16 %v405
        %v1015 = vunpack.c.l.b16 %v406
        %v1016 = vunpack.c.l.b16 %v407
        %v1017 = vunpack.c.l.b16 %v408
        %v1018 = vunpack.c.l.b16 %v409
        %v1019 = vunpack.c.l.b16 %v410
        %v1020 = vunpack.c.l.b16 %v411
        %v1021 = vunpack.c.l.b16 %v412
        %v1022 = vunpack.c.l.b16 %v413
        %v1023 = vunpack.c.l.b16 %v414
        %v1024 = vunpack.c.l.b16 %v415
        %v1025 = vunpack.c.l.b16 %v416
        %v1026 = vunpack.c.l.b16 %v417
        %v1027 = vunpack.c.l.b16 %v418
        %v1028 = vunpack.c.l.b16 %v419
        %v1029 = vunpack.c.l.b16 %v420
        %v1030 = vunpack.c.l.b16 %v421
        %v1031 = vunpack.c.l.b16 %v422
        %v1032 = vunpack.c.l.b16 %v423
        %v1033 = vunpack.c.l.b16 %v424
        %v1034 = vunpack.c.l.b16 %v425
        %v1035 = vunpack.c.l.b16 %v426
        %v1036 = vunpack.c.l.b16 %v427
        %v1037 = vunpack.c.l.b16 %v428
        %v1038 = vunpack.c.l.b16 %v429
        %v1039 = vunpack.c.l.b16 %v430
        %v1040 = vunpack.c.l.b16 %v431
        %v1041 = vunpack.c.l.b16 %v432
        %v1042 = vunpack.c.l.b16 %v433
        %v1043 = vunpack.c.l.b16 %v434
        %v1044 = vunpack.c.l.b16 %v435
        %v1045 = vunpack.c.l.b16 %v436
        %v1046 = vunpack.c.l.b16 %v437
        %v1047 = vunpack.c.l.b16 %v438
        %v1048 = vunpack.c.l.b16 %v439
        %v1049 = vunpack.c.l.b16 %v440
        %v1050 = vunpack.c.l.b16 %v441
        %v1051 = vunpack.c.l.b16 %v442
        %v1052 = vunpack.c.l.b16 %v443
        %v1053 = vunpack.c.l.b16 %v444
        %v1054 = vunpack.c.l.b16 %v445
        %v1055 = vunpack.c.l.b16 %v446
        %v1056 = vunpack.c.l.b16 %v447
        %v1057 = vunpack.c.l.b16 %v448
        %v1058 = vunpack.c.l.b16 %v449
        %v1059 = vunpack.c.l.b16 %v450
        %v1060 = vunpack.c.l.b16 %v451
        %v1061 = vunpack.c.l.b16 %v452
        %v1062 = vunpack.c.l.b16 %v453
        %v1063 = vunpack.c.l.b16 %v454
        %v1064 = vunpack.c.l.b16 %v455
        %v1065 = vunpack.c.l.b16 %v456
        %v1066 = vunpack.c.l.b16 %v457
        %v1067 = vunpack.c.l.b16 %v458
        %v1068 = vunpack.c.l.b16 %v459
        %v1069 = vunpack.c.l.b16 %v460
        %v1070 = vunpack.c.l.b16 %v461
        %v1071 = vunpack.c.l.b16 %v462
        %v1072 = vunpack.c.l.b16 %v463
        %v1073 = vunpack.c.l.b16 %v464
        %v1074 = vunpack.c.l.b16 %v465
        %v1075 = vunpack.c.l.b16 %v466
        %v1076 = vunpack.c.l.b16 %v467
        %v1077 = vunpack.c.l.b16 %v468
        %v1078 = vunpack.c.l.b16 %v469
        %v1079 = vunpack.c.l.b16 %v470
        %v1080 = vunpack.c.l.b16 %v471
        %v1081 = vunpack.c.l.b16 %v472
        %v1082 = vunpack.c.l.b16 %v473
        %v1083 = vunpack.c.l.b16 %v474
        %v1084 = vunpack.c.l.b16 %v475
        %v1085 = vunpack.c.l.b16 %v476
        %v1086 = vunpack.c.l.b16 %v477
        %v1087 = vunpack.c.l.b16 %v478
        %v1088 = vunpack.c.l.b16 %v479
        %v1089 = vunpack.c.l.b16 %v480
        %v1090 = vunpack.c.l.b16 %v481
        %v1091 = vunpack.c.l.b16 %v482
        %v1092 = vunpack.c.l.b16 %v483
        %v1093 = vunpack.c.l.b16 %v484
        %v1094 = vunpack.c.l.b16 %v485
        %v1095 = vunpack.c.l.b16 %v486
        %v1096 = vunpack.c.l.b16 %v487
        %v1097 = vunpack.c.l.b16 %v488
        %v1098 = vunpack.c.l.b16 %v489
        %v1099 = vunpack.c.l.b16 %v490
        %v1100 = vunpack.c.l.b16 %v491
        %v1101 = vunpack.c.l.b16 %v492
        %v1102 = vunpack.c.l.b16 %v493
        %v1103 = vunpack.c.l.b16 %v494
        %v1104 = vunpack.c.l.b16 %v495
        %v1105 = vunpack.c.l.b16 %v496
        %v1106 = vunpack.c.l.b16 %v497
        %v1107 = vunpack.c.l.b16 %v498
        %v1108 = vunpack.c.l.b16 %v499
        %v1109 = vunpack.c.l.b16 %v500
        %v1110 = vunpack.c.l.b16 %v501
        %v1111 = vunpack.c.l.b16 %v502
        %v1112 = vunpack.c.l.b16 %v503
        %v1113 = vunpack.c.l.b16 %v504
        %v1114 = vunpack.c.l.b16 %v505
        %v1115 = vunpack.c.l.b16 %v506
        %v1116 = vunpack.c.l.b16 %v507
        %v1117 = vunpack.c.l.b16 %v508
        %v1118 = vunpack.c.l.b16 %v509
        %v1119 = vunpack.c.l.b16 %v510
        %v1120 = vunpack.c.l.b16 %v511
        %v1121 = vunpack.c.l.b16 %v512
        %v1122 = vunpack.c.l.b16 %v513
        %v1123 = vunpack.c.l.b16 %v514
        %v1124 = vunpack.c.l.b16 %v515
        %v1125 = vpack.c.b16 %v854, %v853
        %v1126 = vpack.c.b16 %v856, %v855
        %v1127 = vpack.c.b16 %v858, %v857
        %v1128 = vpack.c.b16 %v860, %v859
        %v1129 = vpack.c.b16 %v862, %v861
        %v1130 = vpack.c.b16 %v864, %v863
        %v1131 = vpack.c.b16 %v866, %v865
        %v1132 = vpack.c.b16 %v868, %v867
        %v1133 = vpack.c.b16 %v870, %v869
        %v1134 = vpack.c.b16 %v872, %v871
        %v1135 = vpack.c.b16 %v874, %v873
        %v1136 = vpack.c.b16 %v876, %v875
        %v1137 = vpack.c.b16 %v878, %v877
        %v1138 = vpack.c.b16 %v880, %v879
        %v1139 = vpack.c.b16 %v882, %v881
        %v1140 = vpack.c.b16 %v884, %v883
        %v1141 = vpack.c.b16 %v886, %v885
        %v1142 = vpack.c.b16 %v888, %v887
        %v1143 = vpack.c.b16 %v890, %v889
        %v1144 = vpack.c.b16 %v892, %v891
        %v1145 = vpack.c.b16 %v894, %v893
        %v1146 = vpack.c.b16 %v896, %v895
        %v1147 = vpack.c.b16 %v898, %v897
        %v1148 = vpack.c.b16 %v900, %v899
        %v1149 = vpack.c.b16 %v902, %v901
        %v1150 = vpack.c.b16 %v904, %v903
        %v1151 = vpack.c.b16 %v906, %v905
        %v1152 = vpack.c.b16 %v908, %v907
        %v1153 = vpack.c.b16 %v910, %v909
        %v1154 = vpack.c.b16 %v912, %v911
        %v1155 = vpack.c.b16 %v914, %v913
        %v1156 = vpack.c.b16 %v916, %v915
        %v1157 = vpack.c.b16 %v918, %v917
        %v1158 = vpack.c.b16 %v920, %v919
        %v1159 = vpack.c.b16 %v922, %v921
        %v1160 = vpack.c.b16 %v924, %v923
        %v1161 = vpack.c.b16 %v926, %v925
        %v1162 = vpack.c.b16 %v928, %v927
        %v1163 = vpack.c.b16 %v930, %v929
        %v1164 = vpack.c.b16 %v932, %v931
        %v1165 = vpack.c.b16 %v934, %v933
        %v1166 = vpack.c.b16 %v936, %v935
        %v1167 = vpack.c.b16 %v938, %v937
        %v1168 = vpack.c.b16 %v940, %v939
        %v1169 = vpack.c.b16 %v942, %v941
        %v1170 = vpack.c.b16 %v944, %v943
        %v1171 = vpack.c.b16 %v946, %v945
        %v1172 = vpack.c.b16 %v948, %v947
        %v1173 = vpack.c.b16 %v950, %v949
        %v1174 = vpack.c.b16 %v952, %v951
        %v1175 = vpack.c.b16 %v954, %v953
        %v1176 = vpack.c.b16 %v956, %v955
        %v1177 = vpack.c.b16 %v958, %v957
        %v1178 = vpack.c.b16 %v960, %v959
        %v1179 = vpack.c.b16 %v962, %v961
        %v1180 = vpack.c.b16 %v964, %v963
        %v1181 = vpack.c.b16 %v966, %v965
        %v1182 = vpack.c.b16 %v968, %v967
        %v1183 = vpack.c.b16 %v970, %v969
        %v1184 = vpack.c.b16 %v972, %v971
        %v1185 = vpack.c.b16 %v974, %v973
        %v1186 = vpack.c.b16 %v976, %v975
        %v1187 = vpack.c.b16 %v978, %v977
        %v1188 = vpack.c.b16 %v980, %v979
        %v1189 = vpack.c.b16 %v982, %v981
        %v1190 = vpack.c.b16 %v984, %v983
        %v1191 = vpack.c.b16 %v986, %v985
        %v1192 = vpack.c.b16 %v988, %v987
        %v1193 = vpack.c.b16 %v990, %v989
        %v1194 = vpack.c.b16 %v992, %v991
        %v1195 = vpack.c.b16 %v994, %v993
        %v1196 = vpack.c.b16 %v996, %v995
        %v1197 = vpack.c.b16 %v998, %v997
        %v1198 = vpack.c.b16 %v1000, %v999
        %v1199 = vpack.c.b16 %v1002, %v1001
        %v1200 = vpack.c.b16 %v1004, %v1003
        %v1201 = vpack.c.b16 %v1006, %v1005
        %v1202 = vpack.c.b16 %v1008, %v1007
        %v1203 = vpack.c.b16 %v1010, %v1009
        %v1204 = vpack.c.b16 %v1012, %v1011
        %v1205 = vpack.c.b16 %v1014, %v1013
        %v1206 = vpack.c.b16 %v1016, %v1015
        %v1207 = vpack.c.b16 %v1018, %v1017
        %v1208 = vpack.c.b16 %v1020, %v1019
        %v1209 = vpack.c.b16 %v1022, %v1021
        %v1210 = vpack.c.b16 %v1024, %v1023
        %v1211 = vpack.c.b16 %v1026, %v1025
        %v1212 = vpack.c.b16 %v1028, %v1027
        %v1213 = vpack.c.b16 %v1030, %v1029
        %v1214 = vpack.c.b16 %v1032, %v1031
        %v1215 = vpack.c.b16 %v1034, %v1033
        %v1216 = vpack.c.b16 %v1036, %v1035
        %v1217 = vpack.c.b16 %v1038, %v1037
        %v1218 = vpack.c.b16 %v1040, %v1039
        %v1219 = vpack.c.b16 %v1042, %v1041
        %v1220 = vpack.c.b16 %v1044, %v1043
        %v1221 = vpack.c.b16 %v1046, %v1045
        %v1222 = vpack.c.b16 %v1048, %v1047
        %v1223 = vpack.c.b16 %v1050, %v1049
        %v1224 = vpack.c.b16 %v1052, %v1051
        %v1225 = vpack.c.b16 %v1054, %v1053
        %v1226 = vpack.c.b16 %v1056, %v1055
        %v1227 = vpack.c.b16 %v1058, %v1057
        %v1228 = vpack.c.b16 %v1060, %v1059
        %v1229 = vpack.c.b16 %v1062, %v1061
        %v1230 = vpack.c.b16 %v1064, %v1063
        %v1231 = vpack.c.b16 %v1066, %v1065
        %v1232 = vpack.c.b16 %v1068, %v1067
        %v1233 = vpack.c.b16 %v1070, %v1069
        %v1234 = vpack.c.b16 %v1072, %v1071
        %v1235 = vpack.c.b16 %v1074, %v1073
        %v1236 = vpack.c.b16 %v1076, %v1075
        %v1237 = vpack.c.b16 %v1078, %v1077
        %v1238 = vpack.c.b16 %v1080, %v1079
        %v1239 = vpack.c.b16 %v1082, %v1081
        %v1240 = vpack.c.b16 %v1084, %v1083
        %v1241 = vpack.c.b16 %v1086, %v1085
        %v1242 = vpack.c.b16 %v1088, %v1087
        %v1243 = vpack.c.b16 %v1090, %v1089
        %v1244 = vpack.c.b16 %v1092, %v1091
        %v1245 = vpack.c.b16 %v1094, %v1093
        %v1246 = vpack.c.b16 %v1096, %v1095
        %v1247 = vpack.c.b16 %v1098, %v1097
        %v1248 = vpack.c.b16 %v1100, %v1099
        %v1249 = vpack.c.b16 %v1102, %v1101
        %v1250 = vpack.c.b16 %v1104, %v1103
        %v1251 = vpack.c.b16 %v1106, %v1105
        %v1252 = vpack.c.b16 %v1108, %v1107
        %v1253 = vpack.c.b16 %v1110, %v1109
        %v1254 = vpack.c.b16 %v1112, %v1111
        %v1255 = vpack.c.b16 %v1114, %v1113
        %v1256 = vpack.c.b16 %v1116, %v1115
        %v1257 = vpack.c.b16 %v1118, %v1117
        %v1258 = vpack.c.b16 %v1120, %v1119
        %v1259 = vpack.c.b16 %v1122, %v1121
        %v1260 = vpack.c.b16 %v1124, %v1123
        %1397 = vmatprep.subr.bf16.mxu0 0
        %1398 = vmatpush1.bf16.msra.mxu0 %v1125
        %1399 = vmatprep.subr.bf16.mxu0 0
        %1400 = vmatpush1.bf16.msra.mxu0 %v1126
        %1401 = vmatprep.subr.bf16.mxu0 0
        %1402 = vmatpush1.bf16.msra.mxu0 %v1127
        %1403 = vmatprep.subr.bf16.mxu0 0
        %1404 = vmatpush1.bf16.msra.mxu0 %v1128
        %1405 = vmatprep.subr.bf16.mxu0 0
        %1406 = vmatpush1.bf16.msra.mxu0 %v1129
        %1407 = vmatprep.subr.bf16.mxu0 0
        %1408 = vmatpush1.bf16.msra.mxu0 %v1130
        %1409 = vmatprep.subr.bf16.mxu0 0
        %1410 = vmatpush1.bf16.msra.mxu0 %v1131
        %1411 = vmatprep.subr.bf16.mxu0 0
        %1412 = vmatpush1.bf16.msra.mxu0 %v1132
        %1413 = vmatprep.subr.bf16.mxu0 0
        %1414 = vmatpush1.bf16.msra.mxu0 %v1133
        %1415 = vmatprep.subr.bf16.mxu0 0
        %1416 = vmatpush1.bf16.msra.mxu0 %v1134
        %1417 = vmatprep.subr.bf16.mxu0 0
        %1418 = vmatpush1.bf16.msra.mxu0 %v1135
        %1419 = vmatprep.subr.bf16.mxu0 0
        %1420 = vmatpush1.bf16.msra.mxu0 %v1136
        %1421 = vmatprep.subr.bf16.mxu0 0
        %1422 = vmatpush1.bf16.msra.mxu0 %v1137
        %1423 = vmatprep.subr.bf16.mxu0 0
        %1424 = vmatpush1.bf16.msra.mxu0 %v1138
        %1425 = vmatprep.subr.bf16.mxu0 0
        %1426 = vmatpush1.bf16.msra.mxu0 %v1139
        %1427 = vmatprep.subr.bf16.mxu0 0
        %1428 = vmatpush1.bf16.msra.mxu0 %v1140
        %1429 = vmatprep.mubr.bf16.mxu0 %v548
        %1430 = vmatmul.mubr.bf16.gmra.mrb[0].mxu0 %v547
        %v1431 = vpop.f32.mrb[0].mxu0
        %v1432 = vadd.f32 %v520, %v1431
        %v1433 = vpop.f32.mrb[0].mxu0
        %v1434 = vpop.f32.mrb[0].mxu0
        %v1435 = vpop.f32.mrb[0].mxu0
        %1436 = vdwg.mxu0
        %1437 = vmatprep.subr.bf16.mxu0 0
        %1438 = vmatpush1.bf16.msra.mxu0 %v1141
        %1439 = vmatprep.subr.bf16.mxu0 0
        %1440 = vmatpush1.bf16.msra.mxu0 %v1142
        %1441 = vmatprep.subr.bf16.mxu0 0
        %1442 = vmatpush1.bf16.msra.mxu0 %v1143
        %1443 = vmatprep.subr.bf16.mxu0 0
        %1444 = vmatpush1.bf16.msra.mxu0 %v1144
        %1445 = vmatprep.subr.bf16.mxu0 0
        %1446 = vmatpush1.bf16.msra.mxu0 %v1145
        %1447 = vmatprep.subr.bf16.mxu0 0
        %1448 = vmatpush1.bf16.msra.mxu0 %v1146
        %1449 = vmatprep.subr.bf16.mxu0 0
        %1450 = vmatpush1.bf16.msra.mxu0 %v1147
        %1451 = vmatprep.subr.bf16.mxu0 0
        %1452 = vmatpush1.bf16.msra.mxu0 %v1148
        %1453 = vmatprep.subr.bf16.mxu0 0
        %1454 = vmatpush1.bf16.msra.mxu0 %v1149
        %1455 = vmatprep.subr.bf16.mxu0 0
        %1456 = vmatpush1.bf16.msra.mxu0 %v1150
        %1457 = vmatprep.subr.bf16.mxu0 0
        %1458 = vmatpush1.bf16.msra.mxu0 %v1151
        %1459 = vmatprep.subr.bf16.mxu0 0
        %1460 = vmatpush1.bf16.msra.mxu0 %v1152
        %1461 = vmatprep.subr.bf16.mxu0 0
        %1462 = vmatpush1.bf16.msra.mxu0 %v1153
        %1463 = vmatprep.subr.bf16.mxu0 0
        %1464 = vmatpush1.bf16.msra.mxu0 %v1154
        %1465 = vmatprep.subr.bf16.mxu0 0
        %1466 = vmatpush1.bf16.msra.mxu0 %v1155
        %1467 = vmatprep.subr.bf16.mxu0 0
        %1468 = vmatpush1.bf16.msra.mxu0 %v1156
        %1469 = vmatprep.mubr.bf16.mxu0 %v550
        %1470 = vmatmul.mubr.bf16.gmra.mrb[0].mxu0 %v549
        %v1471 = vpop.f32.mrb[0].mxu0
        %v1472 = vadd.f32 %v1432, %v1471
        %v1473 = vpop.f32.mrb[0].mxu0
        %v1474 = vpop.f32.mrb[0].mxu0
        %v1475 = vpop.f32.mrb[0].mxu0
        %1476 = vdwg.mxu0
        %1477 = vmatprep.subr.bf16.mxu0 0
        %1478 = vmatpush1.bf16.msra.mxu0 %v1157
        %1479 = vmatprep.subr.bf16.mxu0 0
        %1480 = vmatpush1.bf16.msra.mxu0 %v1158
        %1481 = vmatprep.subr.bf16.mxu0 0
        %1482 = vmatpush1.bf16.msra.mxu0 %v1159
        %1483 = vmatprep.subr.bf16.mxu0 0
        %1484 = vmatpush1.bf16.msra.mxu0 %v1160
        %1485 = vmatprep.subr.bf16.mxu0 0
        %1486 = vmatpush1.bf16.msra.mxu0 %v1161
        %1487 = vmatprep.subr.bf16.mxu0 0
        %1488 = vmatpush1.bf16.msra.mxu0 %v1162
        %1489 = vmatprep.subr.bf16.mxu0 0
        %1490 = vmatpush1.bf16.msra.mxu0 %v1163
        %1491 = vmatprep.subr.bf16.mxu0 0
        %1492 = vmatpush1.bf16.msra.mxu0 %v1164
        %1493 = vmatprep.subr.bf16.mxu0 0
        %1494 = vmatpush1.bf16.msra.mxu0 %v1165
        %1495 = vmatprep.subr.bf16.mxu0 0
        %1496 = vmatpush1.bf16.msra.mxu0 %v1166
        %1497 = vmatprep.subr.bf16.mxu0 0
        %1498 = vmatpush1.bf16.msra.mxu0 %v1167
        %1499 = vmatprep.subr.bf16.mxu0 0
        %1500 = vmatpush1.bf16.msra.mxu0 %v1168
        %1501 = vmatprep.subr.bf16.mxu0 0
        %1502 = vmatpush1.bf16.msra.mxu0 %v1169
        %1503 = vmatprep.subr.bf16.mxu0 0
        %1504 = vmatpush1.bf16.msra.mxu0 %v1170
        %1505 = vmatprep.subr.bf16.mxu0 0
        %1506 = vmatpush1.bf16.msra.mxu0 %v1171
        %1507 = vmatprep.subr.bf16.mxu0 0
        %1508 = vmatpush1.bf16.msra.mxu0 %v1172
        %1509 = vmatprep.mubr.bf16.mxu0 %v552
        %1510 = vmatmul.mubr.bf16.gmra.mrb[0].mxu0 %v551
        %v1511 = vpop.f32.mrb[0].mxu0
        %v1512 = vadd.f32 %v1472, %v1511
        %v1513 = vpop.f32.mrb[0].mxu0
        %v1514 = vpop.f32.mrb[0].mxu0
        %v1515 = vpop.f32.mrb[0].mxu0
        %1516 = vdwg.mxu0
        %1517 = vmatprep.subr.bf16.mxu0 0
        %1518 = vmatpush1.bf16.msra.mxu0 %v1173
        %1519 = vmatprep.subr.bf16.mxu0 0
        %1520 = vmatpush1.bf16.msra.mxu0 %v1174
        %1521 = vmatprep.subr.bf16.mxu0 0
        %1522 = vmatpush1.bf16.msra.mxu0 %v1175
        %1523 = vmatprep.subr.bf16.mxu0 0
        %1524 = vmatpush1.bf16.msra.mxu0 %v1176
        %1525 = vmatprep.subr.bf16.mxu0 0
        %1526 = vmatpush1.bf16.msra.mxu0 %v1177
        %1527 = vmatprep.subr.bf16.mxu0 0
        %1528 = vmatpush1.bf16.msra.mxu0 %v1178
        %1529 = vmatprep.subr.bf16.mxu0 0
        %1530 = vmatpush1.bf16.msra.mxu0 %v1179
        %1531 = vmatprep.subr.bf16.mxu0 0
        %1532 = vmatpush1.bf16.msra.mxu0 %v1180
        %1533 = vmatprep.subr.bf16.mxu0 0
        %1534 = vmatpush1.bf16.msra.mxu0 %v1181
        %1535 = vmatprep.subr.bf16.mxu0 0
        %1536 = vmatpush1.bf16.msra.mxu0 %v1182
        %1537 = vmatprep.subr.bf16.mxu0 0
        %1538 = vmatpush1.bf16.msra.mxu0 %v1183
        %1539 = vmatprep.subr.bf16.mxu0 0
        %1540 = vmatpush1.bf16.msra.mxu0 %v1184
        %1541 = vmatprep.subr.bf16.mxu0 0
        %1542 = vmatpush1.bf16.msra.mxu0 %v1185
        %1543 = vmatprep.subr.bf16.mxu0 0
        %1544 = vmatpush1.bf16.msra.mxu0 %v1186
        %1545 = vmatprep.subr.bf16.mxu0 0
        %1546 = vmatpush1.bf16.msra.mxu0 %v1187
        %1547 = vmatprep.subr.bf16.mxu0 0
        %1548 = vmatpush1.bf16.msra.mxu0 %v1188
        %1549 = vmatprep.mubr.bf16.mxu0 %v554
        %1550 = vmatmul.mubr.bf16.gmra.mrb[0].mxu0 %v553
        %v1551 = vpop.f32.mrb[0].mxu0
        %v1552 = vadd.f32 %v1512, %v1551
        %v1553 = vpop.f32.mrb[0].mxu0
        %v1554 = vpop.f32.mrb[0].mxu0
        %v1555 = vpop.f32.mrb[0].mxu0
        %1556 = vdwg.mxu0
        %1557 = vmatprep.subr.bf16.mxu0 0
        %1558 = vmatpush1.bf16.msra.mxu0 %v1189
        %1559 = vmatprep.subr.bf16.mxu0 0
        %1560 = vmatpush1.bf16.msra.mxu0 %v1190
        %1561 = vmatprep.subr.bf16.mxu0 0
        %1562 = vmatpush1.bf16.msra.mxu0 %v1191
        %1563 = vmatprep.subr.bf16.mxu0 0
        %1564 = vmatpush1.bf16.msra.mxu0 %v1192
        %1565 = vmatprep.subr.bf16.mxu0 0
        %1566 = vmatpush1.bf16.msra.mxu0 %v1193
        %1567 = vmatprep.subr.bf16.mxu0 0
        %1568 = vmatpush1.bf16.msra.mxu0 %v1194
        %1569 = vmatprep.subr.bf16.mxu0 0
        %1570 = vmatpush1.bf16.msra.mxu0 %v1195
        %1571 = vmatprep.subr.bf16.mxu0 0
        %1572 = vmatpush1.bf16.msra.mxu0 %v1196
        %1573 = vmatprep.subr.bf16.mxu0 0
        %1574 = vmatpush1.bf16.msra.mxu0 %v1197
        %1575 = vmatprep.subr.bf16.mxu0 0
        %1576 = vmatpush1.bf16.msra.mxu0 %v1198
        %1577 = vmatprep.subr.bf16.mxu0 0
        %1578 = vmatpush1.bf16.msra.mxu0 %v1199
        %1579 = vmatprep.subr.bf16.mxu0 0
        %1580 = vmatpush1.bf16.msra.mxu0 %v1200
        %1581 = vmatprep.subr.bf16.mxu0 0
        %1582 = vmatpush1.bf16.msra.mxu0 %v1201
        %1583 = vmatprep.subr.bf16.mxu0 0
        %1584 = vmatpush1.bf16.msra.mxu0 %v1202
        %1585 = vmatprep.subr.bf16.mxu0 0
        %1586 = vmatpush1.bf16.msra.mxu0 %v1203
        %1587 = vmatprep.subr.bf16.mxu0 0
        %1588 = vmatpush1.bf16.msra.mxu0 %v1204
        %1589 = vmatprep.mubr.bf16.mxu0 %v556
        %1590 = vmatmul.mubr.bf16.gmra.mrb[0].mxu0 %v555
        %v1591 = vpop.f32.mrb[0].mxu0
        %v1592 = vadd.f32 %v1552, %v1591
        %v1593 = vpop.f32.mrb[0].mxu0
        %v1594 = vpop.f32.mrb[0].mxu0
        %v1595 = vpop.f32.mrb[0].mxu0
        %1596 = vdwg.mxu0
        %1597 = vmatprep.subr.bf16.mxu0 0
        %1598 = vmatpush1.bf16.msra.mxu0 %v1205
        %1599 = vmatprep.subr.bf16.mxu0 0
        %1600 = vmatpush1.bf16.msra.mxu0 %v1206
        %1601 = vmatprep.subr.bf16.mxu0 0
        %1602 = vmatpush1.bf16.msra.mxu0 %v1207
        %1603 = vmatprep.subr.bf16.mxu0 0
        %1604 = vmatpush1.bf16.msra.mxu0 %v1208
        %1605 = vmatprep.subr.bf16.mxu0 0
        %1606 = vmatpush1.bf16.msra.mxu0 %v1209
        %1607 = vmatprep.subr.bf16.mxu0 0
        %1608 = vmatpush1.bf16.msra.mxu0 %v1210
        %1609 = vmatprep.subr.bf16.mxu0 0
        %1610 = vmatpush1.bf16.msra.mxu0 %v1211
        %1611 = vmatprep.subr.bf16.mxu0 0
        %1612 = vmatpush1.bf16.msra.mxu0 %v1212
        %1613 = vmatprep.subr.bf16.mxu0 0
        %1614 = vmatpush1.bf16.msra.mxu0 %v1213
        %1615 = vmatprep.subr.bf16.mxu0 0
        %1616 = vmatpush1.bf16.msra.mxu0 %v1214
        %1617 = vmatprep.subr.bf16.mxu0 0
        %1618 = vmatpush1.bf16.msra.mxu0 %v1215
        %1619 = vmatprep.subr.bf16.mxu0 0
        %1620 = vmatpush1.bf16.msra.mxu0 %v1216
        %1621 = vmatprep.subr.bf16.mxu0 0
        %1622 = vmatpush1.bf16.msra.mxu0 %v1217
        %1623 = vmatprep.subr.bf16.mxu0 0
        %1624 = vmatpush1.bf16.msra.mxu0 %v1218
        %1625 = vmatprep.subr.bf16.mxu0 0
        %1626 = vmatpush1.bf16.msra.mxu0 %v1219
        %1627 = vmatprep.subr.bf16.mxu0 0
        %1628 = vmatpush1.bf16.msra.mxu0 %v1220
        %1629 = vmatprep.mubr.bf16.mxu0 %v558
        %1630 = vmatmul.mubr.bf16.gmra.mrb[0].mxu0 %v557
        %v1631 = vpop.f32.mrb[0].mxu0
        %v1632 = vadd.f32 %v1592, %v1631
        %v1633 = vpop.f32.mrb[0].mxu0
        %v1634 = vpop.f32.mrb[0].mxu0
        %v1635 = vpop.f32.mrb[0].mxu0
        %1636 = vdwg.mxu0
        %1637 = vmatprep.subr.bf16.mxu0 0
        %1638 = vmatpush1.bf16.msra.mxu0 %v1221
        %1639 = vmatprep.subr.bf16.mxu0 0
        %1640 = vmatpush1.bf16.msra.mxu0 %v1222
        %1641 = vmatprep.subr.bf16.mxu0 0
        %1642 = vmatpush1.bf16.msra.mxu0 %v1223
        %1643 = vmatprep.subr.bf16.mxu0 0
        %1644 = vmatpush1.bf16.msra.mxu0 %v1224
        %1645 = vmatprep.subr.bf16.mxu0 0
        %1646 = vmatpush1.bf16.msra.mxu0 %v1225
        %1647 = vmatprep.subr.bf16.mxu0 0
        %1648 = vmatpush1.bf16.msra.mxu0 %v1226
        %1649 = vmatprep.subr.bf16.mxu0 0
        %1650 = vmatpush1.bf16.msra.mxu0 %v1227
        %1651 = vmatprep.subr.bf16.mxu0 0
        %1652 = vmatpush1.bf16.msra.mxu0 %v1228
        %1653 = vmatprep.subr.bf16.mxu0 0
        %1654 = vmatpush1.bf16.msra.mxu0 %v1229
        %1655 = vmatprep.subr.bf16.mxu0 0
        %1656 = vmatpush1.bf16.msra.mxu0 %v1230
        %1657 = vmatprep.subr.bf16.mxu0 0
        %1658 = vmatpush1.bf16.msra.mxu0 %v1231
        %1659 = vmatprep.subr.bf16.mxu0 0
        %1660 = vmatpush1.bf16.msra.mxu0 %v1232
        %1661 = vmatprep.subr.bf16.mxu0 0
        %1662 = vmatpush1.bf16.msra.mxu0 %v1233
        %1663 = vmatprep.subr.bf16.mxu0 0
        %1664 = vmatpush1.bf16.msra.mxu0 %v1234
        %1665 = vmatprep.subr.bf16.mxu0 0
        %1666 = vmatpush1.bf16.msra.mxu0 %v1235
        %1667 = vmatprep.subr.bf16.mxu0 0
        %1668 = vmatpush1.bf16.msra.mxu0 %v1236
        %1669 = vmatprep.mubr.bf16.mxu0 %v560
        %1670 = vmatmul.mubr.bf16.gmra.mrb[0].mxu0 %v559
        %v1671 = vpop.f32.mrb[0].mxu0
        %v1672 = vadd.f32 %v1632, %v1671
        %v1673 = vpop.f32.mrb[0].mxu0
        %v1674 = vpop.f32.mrb[0].mxu0
        %v1675 = vpop.f32.mrb[0].mxu0
        %1676 = vdwg.mxu0
        %1677 = vmatprep.subr.bf16.mxu0 0
        %1678 = vmatpush1.bf16.msra.mxu0 %v1237
        %1679 = vmatprep.subr.bf16.mxu0 0
        %1680 = vmatpush1.bf16.msra.mxu0 %v1238
        %1681 = vmatprep.subr.bf16.mxu0 0
        %1682 = vmatpush1.bf16.msra.mxu0 %v1239
        %1683 = vmatprep.subr.bf16.mxu0 0
        %1684 = vmatpush1.bf16.msra.mxu0 %v1240
        %1685 = vmatprep.subr.bf16.mxu0 0
        %1686 = vmatpush1.bf16.msra.mxu0 %v1241
        %1687 = vmatprep.subr.bf16.mxu0 0
        %1688 = vmatpush1.bf16.msra.mxu0 %v1242
        %1689 = vmatprep.subr.bf16.mxu0 0
        %1690 = vmatpush1.bf16.msra.mxu0 %v1243
        %1691 = vmatprep.subr.bf16.mxu0 0
        %1692 = vmatpush1.bf16.msra.mxu0 %v1244
        %1693 = vmatprep.subr.bf16.mxu0 0
        %1694 = vmatpush1.bf16.msra.mxu0 %v1245
        %1695 = vmatprep.subr.bf16.mxu0 0
        %1696 = vmatpush1.bf16.msra.mxu0 %v1246
        %1697 = vmatprep.subr.bf16.mxu0 0
        %1698 = vmatpush1.bf16.msra.mxu0 %v1247
        %1699 = vmatprep.subr.bf16.mxu0 0
        %1700 = vmatpush1.bf16.msra.mxu0 %v1248
        %1701 = vmatprep.subr.bf16.mxu0 0
        %1702 = vmatpush1.bf16.msra.mxu0 %v1249
        %1703 = vmatprep.subr.bf16.mxu0 0
        %1704 = vmatpush1.bf16.msra.mxu0 %v1250
        %1705 = vmatprep.subr.bf16.mxu0 0
        %1706 = vmatpush1.bf16.msra.mxu0 %v1251
        %1707 = vmatprep.subr.bf16.mxu0 0
        %1708 = vmatpush1.bf16.msra.mxu0 %v1252
        %1709 = vmatprep.mubr.bf16.mxu0 %v562
        %1710 = vmatmul.mubr.bf16.gmra.mrb[0].mxu0 %v561
        %v1711 = vpop.f32.mrb[0].mxu0
        %v1712 = vadd.f32 %v1672, %v1711
        %v1713 = vpop.f32.mrb[0].mxu0
        %v1714 = vpop.f32.mrb[0].mxu0
        %v1715 = vpop.f32.mrb[0].mxu0
        %1716 = vdwg.mxu0
        %1717 = vmatprep.subr.bf16.mxu0 0
        %1718 = vmatpush1.bf16.msra.mxu0 %v1253
        %1719 = vmatprep.subr.bf16.mxu0 0
        %1720 = vmatpush1.bf16.msra.mxu0 %v1254
        %1721 = vmatprep.subr.bf16.mxu0 0
        %1722 = vmatpush1.bf16.msra.mxu0 %v1255
        %1723 = vmatprep.subr.bf16.mxu0 0
        %1724 = vmatpush1.bf16.msra.mxu0 %v1256
        %1725 = vmatprep.subr.bf16.mxu0 0
        %1726 = vmatpush1.bf16.msra.mxu0 %v1257
        %1727 = vmatprep.subr.bf16.mxu0 0
        %1728 = vmatpush1.bf16.msra.mxu0 %v1258
        %1729 = vmatprep.subr.bf16.mxu0 0
        %1730 = vmatpush1.bf16.msra.mxu0 %v1259
        %1731 = vmatprep.subr.bf16.mxu0 0
        %1732 = vmatpush1.bf16.msra.mxu0 %v1260
        %1733 = vmatprep.subr.bf16.mxu0 0
        %1734 = vmatpush1.bf16.msra.mxu0 0
        %1735 = vmatprep.subr.bf16.mxu0 0
        %1736 = vmatpush1.bf16.msra.mxu0 0
        %1737 = vmatprep.subr.bf16.mxu0 0
        %1738 = vmatpush1.bf16.msra.mxu0 0
        %1739 = vmatprep.subr.bf16.mxu0 0
        %1740 = vmatpush1.bf16.msra.mxu0 0
        %1741 = vmatprep.subr.bf16.mxu0 0
        %1742 = vmatpush1.bf16.msra.mxu0 0
        %1743 = vmatprep.subr.bf16.mxu0 0
        %1744 = vmatpush1.bf16.msra.mxu0 0
        %1745 = vmatprep.subr.bf16.mxu0 0
        %1746 = vmatpush1.bf16.msra.mxu0 0
        %1747 = vmatprep.subr.bf16.mxu0 0
        %1748 = vmatpush1.bf16.msra.mxu0 0
        %1749 = vmatprep.mubr.bf16.mxu0 0
        %1750 = vmatmul.mubr.bf16.gmra.mrb[0].mxu0 %v563
        %v1751 = vpop.f32.mrb[0].mxu0
        %v1752 = vadd.f32 %v1712, %v1751
        %v1753 = vpop.f32.mrb[0].mxu0
        %v1754 = vpop.f32.mrb[0].mxu0
        %v1755 = vpop.f32.mrb[0].mxu0
        %1756 = vdwg.mxu0
        %v1757 = vld [vmem:[%s3 + $0x1] sm:$0x1]
        %v1758 = vld [vmem:[%s3 + $0x2] sm:$0x1]
        %1759 = vadd.xlane.f32.xlu0 %v1752
        %v1760 = vpop.xlane.xlu0 %1759
        %v1761 = vrcp.pop 128.0
        %v1762 = vmul.f32 %v1760, %v1761
        %v1763 = vsub.f32 %v1752, %v1762
        %v1764 = vmul.f32 %v1763, %v1763
        %1765 = vadd.xlane.f32.xlu0 %v1764
        %v1766 = vpop.xlane.xlu0 %1765
        %v1767 = vmul.f32 %v1766, %v1761
        %v1768 = vadd.f32 %v1767, 1e-05
        %v1769 = vrsqrt.pop %v1768
        %v1770 = vmul.f32 %v1763, %v1769
        %v1771 = vlaneseq
        %v1772 = vshrl.u32 %v1771, 7
        %v1773 = vsub.s32 0, %v1772
        %v1774 = vrot.slane %v1757, %v1773
        %v1775 = vmul.f32 %v1770, %v1774
        %v1776 = vlaneseq
        %v1777 = vshrl.u32 %v1776, 7
        %v1778 = vsub.s32 0, %v1777
        %v1779 = vrot.slane %v1758, %v1778
        %v1780 = vadd.f32 %v1775, %v1779
        %v1781 = vpack.c.bf16 %v1780, %v1780
        %v1782 = vld [vmem:[%s2] sm:$0xff]
        %v1783 = vld [vmem:[%s2 + $0x8] sm:$0xf]
        %v1784 = vld [vmem:[%s2 + $0x14] sm:$0xff]
        %v1785 = vld [vmem:[%s2 + $0x1c] sm:$0xf]
        %v1786 = vld [vmem:[%s2 + $0x28] sm:$0xff]
        %v1787 = vld [vmem:[%s2 + $0x30] sm:$0xf]
        %v1788 = vld [vmem:[%s2 + $0x3c] sm:$0xff]
        %v1789 = vld [vmem:[%s2 + $0x44] sm:$0xf]
        %v1790 = vld [vmem:[%s2 + $0x50] sm:$0xff]
        %v1791 = vld [vmem:[%s2 + $0x58] sm:$0xf]
        %v1792 = vld [vmem:[%s2 + $0x64] sm:$0xff]
        %v1793 = vld [vmem:[%s2 + $0x6c] sm:$0xf]
        %v1794 = vld [vmem:[%s2 + $0x78] sm:$0xff]
        %v1795 = vld [vmem:[%s2 + $0x80] sm:$0xf]
        %v1796 = vld [vmem:[%s2 + $0x8c] sm:$0xff]
        %v1797 = vld [vmem:[%s2 + $0x94] sm:$0xf]
        %v1798 = vld [vmem:[%s2 + $0xa0] sm:$0xff]
        %v1799 = vld [vmem:[%s2 + $0xa8] sm:$0xf]
        %v1800 = vld [vmem:[%s2 + $0xb4] sm:$0xff]
        %v1801 = vld [vmem:[%s2 + $0xbc] sm:$0xf]
        %v1802 = vld [vmem:[%s2 + $0xc8] sm:$0xff]
        %v1803 = vld [vmem:[%s2 + $0xd0] sm:$0xf]
        %v1804 = vld [vmem:[%s2 + $0xdc] sm:$0xff]
        %v1805 = vld [vmem:[%s2 + $0xe4] sm:$0xf]
        %v1806 = vld [vmem:[%s2 + $0xf0] sm:$0xff]
        %v1807 = vld [vmem:[%s2 + $0xf8] sm:$0xf]
        %v1808 = vld [vmem:[%s2 + $0x104] sm:$0xff]
        %v1809 = vld [vmem:[%s2 + $0x10c] sm:$0xf]
        %v1810 = vld [vmem:[%s2 + $0x118] sm:$0xff]
        %v1811 = vld [vmem:[%s2 + $0x120] sm:$0xf]
        %v1812 = vld [vmem:[%s2 + $0x12c] sm:$0xff]
        %v1813 = vld [vmem:[%s2 + $0x134] sm:$0xf]
        %v1846 = vunpack.c.l.b16 %v1782
        %v1847 = vunpack.c.h.b16 %v1782
        %v1848 = vunpack.c.l.b16 %v1783
        %v1849 = vunpack.c.l.b16 %v1784
        %v1850 = vunpack.c.h.b16 %v1784
        %v1851 = vunpack.c.l.b16 %v1785
        %v1852 = vunpack.c.l.b16 %v1786
        %v1853 = vunpack.c.h.b16 %v1786
        %v1854 = vunpack.c.l.b16 %v1787
        %v1855 = vunpack.c.l.b16 %v1788
        %v1856 = vunpack.c.h.b16 %v1788
        %v1857 = vunpack.c.l.b16 %v1789
        %v1858 = vunpack.c.l.b16 %v1790
        %v1859 = vunpack.c.h.b16 %v1790
        %v1860 = vunpack.c.l.b16 %v1791
        %v1861 = vunpack.c.l.b16 %v1792
        %v1862 = vunpack.c.h.b16 %v1792
        %v1863 = vunpack.c.l.b16 %v1793
        %v1864 = vunpack.c.l.b16 %v1794
        %v1865 = vunpack.c.h.b16 %v1794
        %v1866 = vunpack.c.l.b16 %v1795
        %v1867 = vunpack.c.l.b16 %v1796
        %v1868 = vunpack.c.h.b16 %v1796
        %v1869 = vunpack.c.l.b16 %v1797
        %v1870 = vunpack.c.l.b16 %v1798
        %v1871 = vunpack.c.h.b16 %v1798
        %v1872 = vunpack.c.l.b16 %v1799
        %v1873 = vunpack.c.l.b16 %v1800
        %v1874 = vunpack.c.h.b16 %v1800
        %v1875 = vunpack.c.l.b16 %v1801
        %v1876 = vunpack.c.l.b16 %v1802
        %v1877 = vunpack.c.h.b16 %v1802
        %v1878 = vunpack.c.l.b16 %v1803
        %v1879 = vunpack.c.l.b16 %v1804
        %v1880 = vunpack.c.h.b16 %v1804
        %v1881 = vunpack.c.l.b16 %v1805
        %v1882 = vunpack.c.l.b16 %v1806
        %v1883 = vunpack.c.h.b16 %v1806
        %v1884 = vunpack.c.l.b16 %v1807
        %v1885 = vunpack.c.l.b16 %v1808
        %v1886 = vunpack.c.h.b16 %v1808
        %v1887 = vunpack.c.l.b16 %v1809
        %v1888 = vunpack.c.l.b16 %v1810
        %v1889 = vunpack.c.h.b16 %v1810
        %v1890 = vunpack.c.l.b16 %v1811
        %v1891 = vunpack.c.l.b16 %v1812
        %v1892 = vunpack.c.h.b16 %v1812
        %v1893 = vunpack.c.l.b16 %v1813
        %v1894 = vpack.c.b16 %v1849, %v1846
        %v1895 = vpack.c.b16 %v1850, %v1847
        %v1896 = vpack.c.b16 %v1851, %v1848
        %v1897 = vpack.c.b16 %v1855, %v1852
        %v1898 = vpack.c.b16 %v1856, %v1853
        %v1899 = vpack.c.b16 %v1857, %v1854
        %v1900 = vpack.c.b16 %v1861, %v1858
        %v1901 = vpack.c.b16 %v1862, %v1859
        %v1902 = vpack.c.b16 %v1863, %v1860
        %v1903 = vpack.c.b16 %v1867, %v1864
        %v1904 = vpack.c.b16 %v1868, %v1865
        %v1905 = vpack.c.b16 %v1869, %v1866
        %v1906 = vpack.c.b16 %v1873, %v1870
        %v1907 = vpack.c.b16 %v1874, %v1871
        %v1908 = vpack.c.b16 %v1875, %v1872
        %v1909 = vpack.c.b16 %v1879, %v1876
        %v1910 = vpack.c.b16 %v1880, %v1877
        %v1911 = vpack.c.b16 %v1881, %v1878
        %v1912 = vpack.c.b16 %v1885, %v1882
        %v1913 = vpack.c.b16 %v1886, %v1883
        %v1914 = vpack.c.b16 %v1887, %v1884
        %v1915 = vpack.c.b16 %v1891, %v1888
        %v1916 = vpack.c.b16 %v1892, %v1889
        %v1917 = vpack.c.b16 %v1893, %v1890
        %1942 = vmatprep.subr.bf16.mxu0 %v1895
        %1943 = vmatpush1.bf16.msra.mxu0 %v1894
        %1944 = vmatprep.subr.bf16.mxu0 %v1898
        %1945 = vmatpush1.bf16.msra.mxu0 %v1897
        %1946 = vmatprep.subr.bf16.mxu0 %v1901
        %1947 = vmatpush1.bf16.msra.mxu0 %v1900
        %1948 = vmatprep.subr.bf16.mxu0 %v1904
        %1949 = vmatpush1.bf16.msra.mxu0 %v1903
        %1950 = vmatprep.subr.bf16.mxu0 %v1907
        %1951 = vmatpush1.bf16.msra.mxu0 %v1906
        %1952 = vmatprep.subr.bf16.mxu0 %v1910
        %1953 = vmatpush1.bf16.msra.mxu0 %v1909
        %1954 = vmatprep.subr.bf16.mxu0 %v1913
        %1955 = vmatpush1.bf16.msra.mxu0 %v1912
        %1956 = vmatprep.subr.bf16.mxu0 %v1916
        %1957 = vmatpush1.bf16.msra.mxu0 %v1915
        %1958 = vmatprep.subr.bf16.mxu0 0
        %1959 = vmatpush1.bf16.msra.mxu0 0
        %1960 = vmatprep.subr.bf16.mxu0 0
        %1961 = vmatpush1.bf16.msra.mxu0 0
        %1962 = vmatprep.subr.bf16.mxu0 0
        %1963 = vmatpush1.bf16.msra.mxu0 0
        %1964 = vmatprep.subr.bf16.mxu0 0
        %1965 = vmatpush1.bf16.msra.mxu0 0
        %1966 = vmatprep.subr.bf16.mxu0 0
        %1967 = vmatpush1.bf16.msra.mxu0 0
        %1968 = vmatprep.subr.bf16.mxu0 0
        %1969 = vmatpush1.bf16.msra.mxu0 0
        %1970 = vmatprep.subr.bf16.mxu0 0
        %1971 = vmatpush1.bf16.msra.mxu0 0
        %1972 = vmatprep.subr.bf16.mxu0 0
        %1973 = vmatpush1.bf16.msra.mxu0 0
        %1974 = vmatprep.mubr.bf16.mxu0 0
        %1975 = vmatmul.mubr.bf16.gmra.mrb[0].mxu0 %v1781
        %v1976 = vpop.f32.mrb[0].mxu0
        %v1977 = vadd.f32 0.0, %v1976
        %v1978 = vpop.f32.mrb[0].mxu0
        %v1979 = vadd.f32 0.0, %v1978
        %v1980 = vpop.f32.mrb[0].mxu0
        %v1981 = vpop.f32.mrb[0].mxu0
        %1982 = vdwg.mxu0
        %1983 = vmatprep.subr.bf16.mxu0 0
        %1984 = vmatpush1.bf16.msra.mxu0 %v1896
        %1985 = vmatprep.subr.bf16.mxu0 0
        %1986 = vmatpush1.bf16.msra.mxu0 %v1899
        %1987 = vmatprep.subr.bf16.mxu0 0
        %1988 = vmatpush1.bf16.msra.mxu0 %v1902
        %1989 = vmatprep.subr.bf16.mxu0 0
        %1990 = vmatpush1.bf16.msra.mxu0 %v1905
        %1991 = vmatprep.subr.bf16.mxu0 0
        %1992 = vmatpush1.bf16.msra.mxu0 %v1908
        %1993 = vmatprep.subr.bf16.mxu0 0
        %1994 = vmatpush1.bf16.msra.mxu0 %v1911
        %1995 = vmatprep.subr.bf16.mxu0 0
        %1996 = vmatpush1.bf16.msra.mxu0 %v1914
        %1997 = vmatprep.subr.bf16.mxu0 0
        %1998 = vmatpush1.bf16.msra.mxu0 %v1917
        %1999 = vmatprep.subr.bf16.mxu0 0
        %2000 = vmatpush1.bf16.msra.mxu0 0
        %2001 = vmatprep.subr.bf16.mxu0 0
        %2002 = vmatpush1.bf16.msra.mxu0 0
        %2003 = vmatprep.subr.bf16.mxu0 0
        %2004 = vmatpush1.bf16.msra.mxu0 0
        %2005 = vmatprep.subr.bf16.mxu0 0
        %2006 = vmatpush1.bf16.msra.mxu0 0
        %2007 = vmatprep.subr.bf16.mxu0 0
        %2008 = vmatpush1.bf16.msra.mxu0 0
        %2009 = vmatprep.subr.bf16.mxu0 0
        %2010 = vmatpush1.bf16.msra.mxu0 0
        %2011 = vmatprep.subr.bf16.mxu0 0
        %2012 = vmatpush1.bf16.msra.mxu0 0
        %2013 = vmatprep.subr.bf16.mxu0 0
        %2014 = vmatpush1.bf16.msra.mxu0 0
        %2015 = vmatprep.mubr.bf16.mxu0 0
        %2016 = vmatmul.mubr.bf16.gmra.mrb[0].mxu0 %v1781
        %v2017 = vpop.f32.mrb[0].mxu0
        %v2018 = vadd.f32 0.0, %v2017
        %v2019 = vpop.f32.mrb[0].mxu0
        %v2020 = vpop.f32.mrb[0].mxu0
        %v2021 = vpop.f32.mrb[0].mxu0
        %2022 = vdwg.mxu0
        %v2023 = vld [vmem:[%s3 + $0x3] sm:$0x1]
        %v2024 = vlaneseq
        %v2025 = vshrl.u32 %v2024, 7
        %v2026 = vsub.s32 0, %v2025
        %v2027 = vrot.slane %v2023, %v2026
        %v2028 = vadd.f32 %v1977, %v2027
        %v2029 = vld [vmem:[%s3 + $0x4] sm:$0x1]
        %v2030 = vlaneseq
        %v2031 = vshrl.u32 %v2030, 7
        %v2032 = vsub.s32 0, %v2031
        %v2033 = vrot.slane %v2029, %v2032
        %v2034 = vadd.f32 %v1979, %v2033
        %v2035 = vld [vmem:[%s3 + $0x5] sm:$0x1]
        %v2036 = vlaneseq
        %v2037 = vshrl.u32 %v2036, 7
        %v2038 = vsub.s32 0, %v2037
        %v2039 = vrot.slane %v2035, %v2038
        %v2040 = vadd.f32 %v2018, %v2039
        %2041 = vst [vmem:[%s221] sm:$0xff] %v2028
        %2042 = vst [vmem:[%s221 + $0x8] sm:$0xff] %v2034
        %v2043 = vadd.f32 %v1752, %v2040
        %v2044 = vld [vmem:[%s3 + $0x6] sm:$0x1]
        %v2045 = vld [vmem:[%s3 + $0x7] sm:$0x1]
        %2046 = vadd.xlane.f32.xlu0 %v2043
        %v2047 = vpop.xlane.xlu0 %2046
        %v2048 = vmul.f32 %v2047, %v1761
        %v2049 = vsub.f32 %v2043, %v2048
        %v2050 = vmul.f32 %v2049, %v2049
        %2051 = vadd.xlane.f32.xlu0 %v2050
        %v2052 = vpop.xlane.xlu0 %2051
        %v2053 = vmul.f32 %v2052, %v1761
        %v2054 = vadd.f32 %v2053, 1e-05
        %v2055 = vrsqrt.pop %v2054
        %v2056 = vmul.f32 %v2049, %v2055
        %v2057 = vlaneseq
        %v2058 = vshrl.u32 %v2057, 7
        %v2059 = vsub.s32 0, %v2058
        %v2060 = vrot.slane %v2044, %v2059
        %v2061 = vmul.f32 %v2056, %v2060
        %v2062 = vlaneseq
        %v2063 = vshrl.u32 %v2062, 7
        %v2064 = vsub.s32 0, %v2063
        %v2065 = vrot.slane %v2045, %v2064
        %v2066 = vadd.f32 %v2061, %v2065
        %v2067 = vpack.c.bf16 %v2066, %v2066
        %v2068 = vld [vmem:[%s2 + $0xc] sm:$0xf]
        %v2069 = vld [vmem:[%s2 + $0x20] sm:$0xf]
        %v2070 = vld [vmem:[%s2 + $0x34] sm:$0xf]
        %v2071 = vld [vmem:[%s2 + $0x48] sm:$0xf]
        %v2072 = vld [vmem:[%s2 + $0x5c] sm:$0xf]
        %v2073 = vld [vmem:[%s2 + $0x70] sm:$0xf]
        %v2074 = vld [vmem:[%s2 + $0x84] sm:$0xf]
        %v2075 = vld [vmem:[%s2 + $0x98] sm:$0xf]
        %v2076 = vld [vmem:[%s2 + $0xac] sm:$0xf]
        %v2077 = vld [vmem:[%s2 + $0xc0] sm:$0xf]
        %v2078 = vld [vmem:[%s2 + $0xd4] sm:$0xf]
        %v2079 = vld [vmem:[%s2 + $0xe8] sm:$0xf]
        %v2080 = vld [vmem:[%s2 + $0xfc] sm:$0xf]
        %v2081 = vld [vmem:[%s2 + $0x110] sm:$0xf]
        %v2082 = vld [vmem:[%s2 + $0x124] sm:$0xf]
        %v2083 = vld [vmem:[%s2 + $0x138] sm:$0xf]
        %v2084 = vld [vmem:[%s3 + $0x8] sm:$0x1]
        %v2085 = vlaneseq
        %v2086 = vshrl.u32 %v2085, 7
        %v2087 = vsub.s32 0, %v2086
        %v2088 = vrot.slane %v2084, %v2087
        %v2105 = vunpack.c.l.b16 %v2068
        %v2106 = vunpack.c.l.b16 %v2069
        %v2107 = vunpack.c.l.b16 %v2070
        %v2108 = vunpack.c.l.b16 %v2071
        %v2109 = vunpack.c.l.b16 %v2072
        %v2110 = vunpack.c.l.b16 %v2073
        %v2111 = vunpack.c.l.b16 %v2074
        %v2112 = vunpack.c.l.b16 %v2075
        %v2113 = vunpack.c.l.b16 %v2076
        %v2114 = vunpack.c.l.b16 %v2077
        %v2115 = vunpack.c.l.b16 %v2078
        %v2116 = vunpack.c.l.b16 %v2079
        %v2117 = vunpack.c.l.b16 %v2080
        %v2118 = vunpack.c.l.b16 %v2081
        %v2119 = vunpack.c.l.b16 %v2082
        %v2120 = vunpack.c.l.b16 %v2083
        %v2121 = vpack.c.b16 %v2106, %v2105
        %v2122 = vpack.c.b16 %v2108, %v2107
        %v2123 = vpack.c.b16 %v2110, %v2109
        %v2124 = vpack.c.b16 %v2112, %v2111
        %v2125 = vpack.c.b16 %v2114, %v2113
        %v2126 = vpack.c.b16 %v2116, %v2115
        %v2127 = vpack.c.b16 %v2118, %v2117
        %v2128 = vpack.c.b16 %v2120, %v2119
        %2137 = vmatprep.subr.bf16.mxu0 0
        %2138 = vmatpush1.bf16.msra.mxu0 %v2121
        %2139 = vmatprep.subr.bf16.mxu0 0
        %2140 = vmatpush1.bf16.msra.mxu0 %v2122
        %2141 = vmatprep.subr.bf16.mxu0 0
        %2142 = vmatpush1.bf16.msra.mxu0 %v2123
        %2143 = vmatprep.subr.bf16.mxu0 0
        %2144 = vmatpush1.bf16.msra.mxu0 %v2124
        %2145 = vmatprep.subr.bf16.mxu0 0
        %2146 = vmatpush1.bf16.msra.mxu0 %v2125
        %2147 = vmatprep.subr.bf16.mxu0 0
        %2148 = vmatpush1.bf16.msra.mxu0 %v2126
        %2149 = vmatprep.subr.bf16.mxu0 0
        %2150 = vmatpush1.bf16.msra.mxu0 %v2127
        %2151 = vmatprep.subr.bf16.mxu0 0
        %2152 = vmatpush1.bf16.msra.mxu0 %v2128
        %2153 = vmatprep.subr.bf16.mxu0 0
        %2154 = vmatpush1.bf16.msra.mxu0 0
        %2155 = vmatprep.subr.bf16.mxu0 0
        %2156 = vmatpush1.bf16.msra.mxu0 0
        %2157 = vmatprep.subr.bf16.mxu0 0
        %2158 = vmatpush1.bf16.msra.mxu0 0
        %2159 = vmatprep.subr.bf16.mxu0 0
        %2160 = vmatpush1.bf16.msra.mxu0 0
        %2161 = vmatprep.subr.bf16.mxu0 0
        %2162 = vmatpush1.bf16.msra.mxu0 0
        %2163 = vmatprep.subr.bf16.mxu0 0
        %2164 = vmatpush1.bf16.msra.mxu0 0
        %2165 = vmatprep.subr.bf16.mxu0 0
        %2166 = vmatpush1.bf16.msra.mxu0 0
        %2167 = vmatprep.subr.bf16.mxu0 0
        %2168 = vmatpush1.bf16.msra.mxu0 0
        %2169 = vmatprep.mubr.bf16.mxu0 0
        %2170 = vmatmul.mubr.bf16.gmra.mrb[0].mxu0 %v2067
        %v2171 = vpop.f32.mrb[0].mxu0
        %v2172 = vadd.f32 %v2088, %v2171
        %v2173 = vpop.f32.mrb[0].mxu0
        %v2174 = vpop.f32.mrb[0].mxu0
        %v2175 = vpop.f32.mrb[0].mxu0
        %2176 = vdwg.mxu0
        %v2177 = vmul.f32 %v2172, 0.5
        %v2178 = vmul.f32 %v2172, 0.044715
        %v2179 = vmul.f32 %v2178, %v2172
        %v2180 = vmul.f32 %v2179, %v2172
        %v2181 = vadd.f32 %v2172, %v2180
        %v2182 = vmul.f32 %v2181, 0.7978846
        %v2183 = vtanh.pop %v2182
        %v2184 = vadd.f32 %v2183, 1.0
        %v2185 = vmul.f32 %v2177, %v2184
        %v2186 = vpack.c.bf16 %v2185, %v2185
        %v2187 = vld [vmem:[%s2 + $0x10] sm:$0xf]
        %v2188 = vld [vmem:[%s2 + $0x24] sm:$0xf]
        %v2189 = vld [vmem:[%s2 + $0x38] sm:$0xf]
        %v2190 = vld [vmem:[%s2 + $0x4c] sm:$0xf]
        %v2191 = vld [vmem:[%s2 + $0x60] sm:$0xf]
        %v2192 = vld [vmem:[%s2 + $0x74] sm:$0xf]
        %v2193 = vld [vmem:[%s2 + $0x88] sm:$0xf]
        %v2194 = vld [vmem:[%s2 + $0x9c] sm:$0xf]
        %v2195 = vld [vmem:[%s2 + $0xb0] sm:$0xf]
        %v2196 = vld [vmem:[%s2 + $0xc4] sm:$0xf]
        %v2197 = vld [vmem:[%s2 + $0xd8] sm:$0xf]
        %v2198 = vld [vmem:[%s2 + $0xec] sm:$0xf]
        %v2199 = vld [vmem:[%s2 + $0x100] sm:$0xf]
        %v2200 = vld [vmem:[%s2 + $0x114] sm:$0xf]
        %v2201 = vld [vmem:[%s2 + $0x128] sm:$0xf]
        %v2202 = vld [vmem:[%s2 + $0x13c] sm:$0xf]
        %v2203 = vld [vmem:[%s3 + $0x9] sm:$0x1]
        %v2204 = vlaneseq
        %v2205 = vshrl.u32 %v2204, 7
        %v2206 = vsub.s32 0, %v2205
        %v2207 = vrot.slane %v2203, %v2206
        %v2224 = vunpack.c.l.b16 %v2187
        %v2225 = vunpack.c.l.b16 %v2188
        %v2226 = vunpack.c.l.b16 %v2189
        %v2227 = vunpack.c.l.b16 %v2190
        %v2228 = vunpack.c.l.b16 %v2191
        %v2229 = vunpack.c.l.b16 %v2192
        %v2230 = vunpack.c.l.b16 %v2193
        %v2231 = vunpack.c.l.b16 %v2194
        %v2232 = vunpack.c.l.b16 %v2195
        %v2233 = vunpack.c.l.b16 %v2196
        %v2234 = vunpack.c.l.b16 %v2197
        %v2235 = vunpack.c.l.b16 %v2198
        %v2236 = vunpack.c.l.b16 %v2199
        %v2237 = vunpack.c.l.b16 %v2200
        %v2238 = vunpack.c.l.b16 %v2201
        %v2239 = vunpack.c.l.b16 %v2202
        %v2240 = vpack.c.b16 %v2225, %v2224
        %v2241 = vpack.c.b16 %v2227, %v2226
        %v2242 = vpack.c.b16 %v2229, %v2228
        %v2243 = vpack.c.b16 %v2231, %v2230
        %v2244 = vpack.c.b16 %v2233, %v2232
        %v2245 = vpack.c.b16 %v2235, %v2234
        %v2246 = vpack.c.b16 %v2237, %v2236
        %v2247 = vpack.c.b16 %v2239, %v2238
        %2256 = vmatprep.subr.bf16.mxu0 0
        %2257 = vmatpush1.bf16.msra.mxu0 %v2240
        %2258 = vmatprep.subr.bf16.mxu0 0
        %2259 = vmatpush1.bf16.msra.mxu0 %v2241
        %2260 = vmatprep.subr.bf16.mxu0 0
        %2261 = vmatpush1.bf16.msra.mxu0 %v2242
        %2262 = vmatprep.subr.bf16.mxu0 0
        %2263 = vmatpush1.bf16.msra.mxu0 %v2243
        %2264 = vmatprep.subr.bf16.mxu0 0
        %2265 = vmatpush1.bf16.msra.mxu0 %v2244
        %2266 = vmatprep.subr.bf16.mxu0 0
        %2267 = vmatpush1.bf16.msra.mxu0 %v2245
        %2268 = vmatprep.subr.bf16.mxu0 0
        %2269 = vmatpush1.bf16.msra.mxu0 %v2246
        %2270 = vmatprep.subr.bf16.mxu0 0
        %2271 = vmatpush1.bf16.msra.mxu0 %v2247
        %2272 = vmatprep.subr.bf16.mxu0 0
        %2273 = vmatpush1.bf16.msra.mxu0 0
        %2274 = vmatprep.subr.bf16.mxu0 0
        %2275 = vmatpush1.bf16.msra.mxu0 0
        %2276 = vmatprep.subr.bf16.mxu0 0
        %2277 = vmatpush1.bf16.msra.mxu0 0
        %2278 = vmatprep.subr.bf16.mxu0 0
        %2279 = vmatpush1.bf16.msra.mxu0 0
        %2280 = vmatprep.subr.bf16.mxu0 0
        %2281 = vmatpush1.bf16.msra.mxu0 0
        %2282 = vmatprep.subr.bf16.mxu0 0
        %2283 = vmatpush1.bf16.msra.mxu0 0
        %2284 = vmatprep.subr.bf16.mxu0 0
        %2285 = vmatpush1.bf16.msra.mxu0 0
        %2286 = vmatprep.subr.bf16.mxu0 0
        %2287 = vmatpush1.bf16.msra.mxu0 0
        %2288 = vmatprep.mubr.bf16.mxu0 0
        %2289 = vmatmul.mubr.bf16.gmra.mrb[0].mxu0 %v2186
        %v2290 = vpop.f32.mrb[0].mxu0
        %v2291 = vadd.f32 %v2207, %v2290
        %v2292 = vpop.f32.mrb[0].mxu0
        %v2293 = vpop.f32.mrb[0].mxu0
        %v2294 = vpop.f32.mrb[0].mxu0
        %2295 = vdwg.mxu0
        %v2296 = vadd.f32 %v2043, %v2291
        %2297 = vst [vmem:[%s228] sm:$0xff] %v2296
        %s2298 = sand.u32 %s120, 1
        %s2299 = scalar_lea.sflag [#allocation3], %s2298
        %s2300 = sand.u32 %s120, 1
        %s2301 = smul.addr %s2300, 16
        %s2302 = scalar_lea.vmem [#allocation2], %s2301
        %s2303 = sand.u32 %s146, 1
        %s2304 = scalar_lea.sflag [#allocation5], %s2303
        %s2305 = sand.u32 %s146, 1
        %s2306 = smul.addr %s2305, 8
        %s2307 = scalar_lea.vmem [#allocation4], %s2306
        // Predicated region
        $region37: #{atten_cell_forward.1} parent=35 // pred_check
          %p2308 = pneg %p130
        $region38: #{atten_cell_forward.1} parent=35 // pred_check_branch
          %2310 = sbr.rel (%p2308) target = $region40
        $region39: #{atten_cell_forward.1} parent=35 // pred_region
          %s2312 = ssub.s32 256, 256
          %2313 = vsyncadd %s2299, %s2312
          %s2314 = smul.addr %s23, 2
          %s2315 = smul.addr %s2314, 128
          %s2316 = scalar_lea.hbm %s4, %s2315
          %s2318 = sshll.u32 %s2302, 4
          %s2319 = int_to_ptr.vmem [resolvable:$true] %s2318
          %2321 = dma.vmem_to_hbm [thread:$0]  %s2319, 256, %s2316, %s2299
        $region40: #{atten_cell_forward.1} parent=35 // pred_fallthru
          _
        // Predicated region
        $region41: #{atten_cell_forward.1} parent=35 // pred_check
          %p2322 = pneg %p156
        $region42: #{atten_cell_forward.1} parent=35 // pred_check_branch
          %2324 = sbr.rel (%p2322) target = $region44
        $region43: #{atten_cell_forward.1} parent=35 // pred_region
          %s2326 = ssub.s32 128, 128
          %2327 = vsyncadd %s2304, %s2326
          %s2328 = smul.addr %s23, 128
          %s2329 = scalar_lea.hbm %s5, %s2328
          %s2331 = sshll.u32 %s2307, 4
          %s2332 = int_to_ptr.vmem [resolvable:$true] %s2331
          %2334 = dma.vmem_to_hbm [thread:$0]  %s2332, 128, %s2329, %s2304
        $region44: #{atten_cell_forward.1} parent=35 // pred_fallthru
          _
      $region36: #{atten_cell_forward.1} parent=5 // pred_fallthru
        _
      %p2335 = scmp.le.s32.totalorder 2, %s18
      // Predicated region
      $region45: #{atten_cell_forward.1} parent=5 // pred_check
        %p2336 = pneg %p2335
      $region46: #{atten_cell_forward.1} parent=5 // pred_check_branch
        %2338 = sbr.rel (%p2336) target = $region48
      $region47: #{atten_cell_forward.1} parent=5 // pred_region
        %s2339 = ssub.s32 %s18, 2
        // Predicated region
        $region49: #{atten_cell_forward.1} parent=47 // pred_check
          %p2340 = pneg %p136
        $region50: #{atten_cell_forward.1} parent=47 // pred_check_branch
          %2342 = sbr.rel (%p2340) target = $region52
        $region51: #{atten_cell_forward.1} parent=47 // pred_region
          %s2343 = sand.u32 %s121, 1
          %s2344 = scalar_lea.sflag [#allocation3], %s2343
          %s2345 = sand.u32 %s121, 1
          %s2346 = smul.addr %s2345, 16
          %s2347 = scalar_lea.vmem [#allocation2], %s2346
          %2348 = dma.done %s2344, 256
        $region52: #{atten_cell_forward.1} parent=47 // pred_fallthru
          _
        // Predicated region
        $region53: #{atten_cell_forward.1} parent=47 // pred_check
          %p2349 = pneg %p162
        $region54: #{atten_cell_forward.1} parent=47 // pred_check_branch
          %2351 = sbr.rel (%p2349) target = $region56
        $region55: #{atten_cell_forward.1} parent=47 // pred_region
          %s2352 = sand.u32 %s147, 1
          %s2353 = scalar_lea.sflag [#allocation5], %s2352
          %s2354 = sand.u32 %s147, 1
          %s2355 = smul.addr %s2354, 8
          %s2356 = scalar_lea.vmem [#allocation4], %s2355
          %2357 = dma.done %s2353, 128
        $region56: #{atten_cell_forward.1} parent=47 // pred_fallthru
          _
      $region48: #{atten_cell_forward.1} parent=5 // pred_fallthru
        _
    $region6: #{atten_cell_forward.1} parent=1 // loop_footer
      %s22 = sadd.s32 1, %s18
    $region7: #{atten_cell_forward.1} parent=1 // loop_footer_branch
      %17 = sbr.rel target = $region3
    $region8: #{atten_cell_forward.1} parent=1 // loop_exit
      _
    %2358 = vsyncpa [#allocation3], 1
    %s2359 = scalar_lea.sflag [#allocation3], 1
    %2360 = vsyncpa %s2359, 1
    %2361 = vsyncpa [#allocation5], 1
    %s2362 = scalar_lea.sflag [#allocation5], 1
    %2363 = vsyncpa %s2362, 1

</llo_original>
